<compile_context>
chip_gen: v6e
topology: v6e:2x2x1
jax: 0.10.0
libtpu: 0.0.40
codegen_flags: <defaults>
</compile_context>

<pallas_src>
import functools

import jax
import jax.numpy as jnp
from jax import lax
from jax.experimental import pallas as pl
from jax.experimental.pallas import tpu as pltpu

# ---- tiny config (same topology as BERT-base, small sizes) ----
VOCAB = 100
TYPE_VOCAB = 2
MAX_POS = 16
HIDDEN = 32
N_LAYERS = 2
N_HEADS = 4
HEAD_DIM = HIDDEN // N_HEADS
INTER = 64
LN_EPS = 1e-12


# ------------------------- kernel helpers -------------------------

def _layernorm(x, g, b, eps):
    mu = jnp.mean(x, axis=-1, keepdims=True)
    xc = x - mu
    var = jnp.mean(xc * xc, axis=-1, keepdims=True)
    return xc * lax.rsqrt(var + eps) * g + b


# ------------------------- fused encoder kernel -------------------------
# grid = (B, N_LAYERS); one grid step = one transformer layer for one batch
# element. The output block (1, S, H) for batch b is resident across the
# layer axis and carries the hidden state between layers.

def _encoder_kernel(emb_ref, mask_ref, eg_ref, eb_ref,
                    wqkv_ref, bqkv_ref, wo_ref, bo_ref, ln1g_ref, ln1b_ref,
                    wi_ref, bi_ref, wo2_ref, bo2_ref, ln2g_ref, ln2b_ref,
                    h_ref, *, n_heads, head_dim, eps):
    layer = pl.program_id(1)
    hidden = n_heads * head_dim
    scale = 1.0 / (head_dim ** 0.5)

    # Layer step 0: embedding LayerNorm (no residual) initializes the state.
    @pl.when(layer == 0)
    def _():
        h_ref[0] = _layernorm(emb_ref[0], eg_ref[...], eb_ref[...], eps)

    h = h_ref[0]                       # (S, H) f32, carried in VMEM
    mask = mask_ref[0]                 # (1, S) additive attention mask (f32)

    # --- fused QKV projection (bf16 MXU operands, f32 accumulation) ---
    h_b = h.astype(jnp.bfloat16)
    qkv = jnp.dot(h_b, wqkv_ref[0],
                  preferred_element_type=jnp.float32) + bqkv_ref[0]   # (S, 3H)
    q = qkv[:, :hidden]
    k = qkv[:, hidden:2 * hidden]
    v = qkv[:, 2 * hidden:]

    # --- multi-head self-attention; heads unrolled, Wo folded per head ---
    w_o = wo_ref[0]                    # (H, H) bf16
    attn = jnp.zeros(h.shape, jnp.float32)
    for hh in range(n_heads):
        sl = slice(hh * head_dim, (hh + 1) * head_dim)
        qh = q[:, sl].astype(jnp.bfloat16)
        kh = k[:, sl].astype(jnp.bfloat16)
        vh = v[:, sl].astype(jnp.bfloat16)
        s = jnp.einsum("qd,kd->qk", qh, kh,
                       preferred_element_type=jnp.float32) * scale + mask
        s = s - jnp.max(s, axis=-1, keepdims=True)
        e = jnp.exp(s)
        p = e * pl.reciprocal(jnp.sum(e, axis=-1, keepdims=True), approx=True)
        ctx_h = jnp.dot(p.astype(jnp.bfloat16), vh,
                        preferred_element_type=jnp.float32)           # (S, Dh)
        # ctx @ Wo decomposed over heads: sum_h ctx_h @ Wo[h*Dh:(h+1)*Dh, :]
        attn = attn + jnp.dot(ctx_h.astype(jnp.bfloat16), w_o[sl, :],
                              preferred_element_type=jnp.float32)
    attn = attn + bo_ref[0]
    h1 = _layernorm(attn + h, ln1g_ref[0], ln1b_ref[0], eps)

    # --- feed-forward ---
    inter = jnp.dot(h1.astype(jnp.bfloat16), wi_ref[0],
                    preferred_element_type=jnp.float32) + bi_ref[0]
    # TODO(synk): HF BERT uses exact erf-GELU; tanh approximation used here.
    inter = jax.nn.gelu(inter, approximate=True)
    ffn = jnp.dot(inter.astype(jnp.bfloat16), wo2_ref[0],
                  preferred_element_type=jnp.float32) + bo2_ref[0]
    h_ref[0] = _layernorm(ffn + h1, ln2g_ref[0], ln2b_ref[0], eps)


def encoder(emb, add_mask, params):
    B, S, H = emb.shape
    L = params["wqkv"].shape[0]

    const = lambda b, l: (0, 0)
    per_batch = lambda b, l: (b, 0, 0)
    per_layer = lambda b, l: (l, 0, 0)

    in_specs = [
        pl.BlockSpec((1, S, H), per_batch),        # embeddings
        pl.BlockSpec((1, 1, S), per_batch),        # additive mask
        pl.BlockSpec((1, H), const),               # emb LN gamma
        pl.BlockSpec((1, H), const),               # emb LN beta
        pl.BlockSpec((1, H, 3 * H), per_layer),    # wqkv (bf16)
        pl.BlockSpec((1, 1, 3 * H), per_layer),    # bqkv
        pl.BlockSpec((1, H, H), per_layer),        # wo (bf16)
        pl.BlockSpec((1, 1, H), per_layer),        # bo
        pl.BlockSpec((1, 1, H), per_layer),        # ln1 gamma
        pl.BlockSpec((1, 1, H), per_layer),        # ln1 beta
        pl.BlockSpec((1, H, INTER), per_layer),    # wi (bf16)
        pl.BlockSpec((1, 1, INTER), per_layer),    # bi
        pl.BlockSpec((1, INTER, H), per_layer),    # wo2 (bf16)
        pl.BlockSpec((1, 1, H), per_layer),        # bo2
        pl.BlockSpec((1, 1, H), per_layer),        # ln2 gamma
        pl.BlockSpec((1, 1, H), per_layer),        # ln2 beta
    ]
    return pl.pallas_call(
        functools.partial(_encoder_kernel, n_heads=N_HEADS,
                          head_dim=HEAD_DIM, eps=LN_EPS),
        out_shape=jax.ShapeDtypeStruct((B, S, H), jnp.float32),
        grid=(B, L),
        in_specs=in_specs,
        out_specs=pl.BlockSpec((1, S, H), per_batch),
        compiler_params=pltpu.CompilerParams(
            dimension_semantics=("parallel", "arbitrary")),
    )(emb, add_mask,
      params["emb_ln_g"], params["emb_ln_b"],
      params["wqkv"], params["bqkv"], params["wo"], params["bo"],
      params["ln1_g"], params["ln1_b"],
      params["wi"], params["bi"], params["wo2"], params["bo2"],
      params["ln2_g"], params["ln2_b"])


# ------------------------- pooler kernel -------------------------

def _pooler_kernel(cls_ref, pw_ref, pb_ref, o_ref):
    y = jnp.dot(cls_ref[...].astype(jnp.bfloat16), pw_ref[...],
                preferred_element_type=jnp.float32) + pb_ref[...]
    o_ref[...] = jnp.tanh(y)


def pooler(cls, pool_w, pool_b):
    B, H = cls.shape
    return pl.pallas_call(
        _pooler_kernel,
        out_shape=jax.ShapeDtypeStruct((B, H), jnp.float32),
        grid=(1,),
        in_specs=[pl.BlockSpec((B, H), lambda i: (0, 0)),
                  pl.BlockSpec((H, H), lambda i: (0, 0)),
                  pl.BlockSpec((1, H), lambda i: (0, 0))],
        out_specs=pl.BlockSpec((B, H), lambda i: (0, 0)),
    )(cls, pool_w, pool_b)


# ------------------------- parameters -------------------------

def init_params(key):
    keys = iter(jax.random.split(key, 64))

    def dense(fan_in, fan_out):
        w = 0.02 * jax.random.normal(next(keys), (fan_in, fan_out), jnp.float32)
        return w, jnp.zeros((fan_out,), jnp.float32)

    p = {}
    p["word_emb"] = 0.02 * jax.random.normal(next(keys), (VOCAB, HIDDEN), jnp.float32)
    p["pos_emb"] = 0.02 * jax.random.normal(next(keys), (MAX_POS, HIDDEN), jnp.float32)
    p["type_emb"] = 0.02 * jax.random.normal(next(keys), (TYPE_VOCAB, HIDDEN), jnp.float32)
    p["emb_ln_g"] = jnp.ones((1, HIDDEN), jnp.float32)
    p["emb_ln_b"] = jnp.zeros((1, HIDDEN), jnp.float32)

    wqkv, bqkv, wo, bo, ln1g, ln1b = [], [], [], [], [], []
    wi, bi, wo2, bo2, ln2g, ln2b = [], [], [], [], [], []
    for _ in range(N_LAYERS):
        wq, bq = dense(HIDDEN, HIDDEN)
        wk, bk = dense(HIDDEN, HIDDEN)
        wv, bv = dense(HIDDEN, HIDDEN)
        wqkv.append(jnp.concatenate([wq, wk, wv], axis=1))          # (H, 3H)
        bqkv.append(jnp.concatenate([bq, bk, bv]).reshape(1, 3 * HIDDEN))
        w, b = dense(HIDDEN, HIDDEN); wo.append(w); bo.append(b.reshape(1, HIDDEN))
        ln1g.append(jnp.ones((1, HIDDEN), jnp.float32))
        ln1b.append(jnp.zeros((1, HIDDEN), jnp.float32))
        w, b = dense(HIDDEN, INTER); wi.append(w); bi.append(b.reshape(1, INTER))
        w, b = dense(INTER, HIDDEN); wo2.append(w); bo2.append(b.reshape(1, HIDDEN))
        ln2g.append(jnp.ones((1, HIDDEN), jnp.float32))
        ln2b.append(jnp.zeros((1, HIDDEN), jnp.float32))

    # Matmul weights stored in bf16 (MXU operands); biases / LN params in f32.
    p["wqkv"] = jnp.stack(wqkv).astype(jnp.bfloat16)
    p["bqkv"] = jnp.stack(bqkv)
    p["wo"] = jnp.stack(wo).astype(jnp.bfloat16)
    p["bo"] = jnp.stack(bo)
    p["ln1_g"] = jnp.stack(ln1g)
    p["ln1_b"] = jnp.stack(ln1b)
    p["wi"] = jnp.stack(wi).astype(jnp.bfloat16)
    p["bi"] = jnp.stack(bi)
    p["wo2"] = jnp.stack(wo2).astype(jnp.bfloat16)
    p["bo2"] = jnp.stack(bo2)
    p["ln2_g"] = jnp.stack(ln2g)
    p["ln2_b"] = jnp.stack(ln2b)

    pw, pb = dense(HIDDEN, HIDDEN)
    p["pool_w"] = pw.astype(jnp.bfloat16)
    p["pool_b"] = pb.reshape(1, HIDDEN)
    return p


# ------------------------- forward -------------------------

@jax.jit
def simcse_forward(params, input_ids, attention_mask, token_type_ids):
    B, S = input_ids.shape

    # Embedding table lookups are glue (plain JAX gathers).
    pos_ids = jnp.arange(S)
    emb = (jnp.take(params["word_emb"], input_ids, axis=0)
           + jnp.take(params["pos_emb"], pos_ids, axis=0)[None]
           + jnp.take(params["type_emb"], token_type_ids, axis=0))      # (B,S,H)

    add_mask = ((1.0 - attention_mask.astype(jnp.float32)) * -1e9
                ).reshape(B, 1, S)

    h = encoder(emb, add_mask, params)                                  # (B,S,H)
    cls = h[:, 0, :]          # [CLS] rows (glue slice; tanh(Wx+b) in kernel)
    pooled = pooler(cls, params["pool_w"], params["pool_b"])
    return pooled                                                       # (B, H)


if __name__ == "__main__":
    key = jax.random.PRNGKey(0)
    pkey, ikey = jax.random.split(key)
    params = init_params(pkey)

    B, S = 2, 8
    input_ids = jax.random.randint(ikey, (B, S), 0, VOCAB, dtype=jnp.int32)
    attention_mask = jnp.ones((B, S), jnp.int32)
    token_type_ids = jnp.zeros((B, S), jnp.int32)

    out = simcse_forward(params, input_ids, attention_mask, token_type_ids)
    out = jax.block_until_ready(out)
    assert out.shape == (B, HIDDEN)
    assert jnp.all(jnp.isfinite(out))
    print("KERNEL_OK")
</pallas_src>

<mosaic_0001>
module attributes {stable_mosaic.version = 11 : i64} {
  func.func @_pooler_kernel(%arg0: i32, %arg1: memref<2x32xf32, #tpu.memory_space<vmem>>, %arg2: memref<32x32xbf16, #tpu.memory_space<vmem>>, %arg3: memref<1x32xf32, #tpu.memory_space<vmem>>, %arg4: memref<2x32xf32, #tpu.memory_space<vmem>>) attributes {dimension_semantics = [#tpu.dimension_semantics<arbitrary>], iteration_bounds = array<i64: 1>, scalar_prefetch = 0 : i64, scratch_operands = 0 : i64, tpu.core_type = #tpu.core_type<tc>, window_params = [{pipeline_mode = #tpu.pipeline_mode<synchronous>, transform_indices = @transform_0, window_bounds = array<i64: 2, 32>}, {pipeline_mode = #tpu.pipeline_mode<synchronous>, transform_indices = @transform_1, window_bounds = array<i64: 32, 32>}, {pipeline_mode = #tpu.pipeline_mode<synchronous>, transform_indices = @transform_2, window_bounds = array<i64: 1, 32>}, {pipeline_mode = #tpu.pipeline_mode<synchronous>, transform_indices = @transform_3, window_bounds = array<i64: 2, 32>}]} {
    %c0 = arith.constant 0 : index
    %c0_0 = arith.constant 0 : index
    %0 = vector.load %arg1[%c0, %c0_0] : memref<2x32xf32, #tpu.memory_space<vmem>>, vector<2x32xf32>
    %1 = arith.truncf %0 : vector<2x32xf32> to vector<2x32xbf16>
    %c0_1 = arith.constant 0 : index
    %c0_2 = arith.constant 0 : index
    %2 = vector.load %arg2[%c0_1, %c0_2] : memref<32x32xbf16, #tpu.memory_space<vmem>>, vector<32x32xbf16>
    %cst = arith.constant dense<0.000000e+00> : vector<2x32xf32>
    %3 = tpu.matmul %1, %2, %cst {dimension_numbers = #tpu.dot_dimension_numbers<[1], [0], [0], [1], [0, 0, 1, 1], [], []>} : vector<2x32xbf16>, vector<32x32xbf16>, vector<2x32xf32> -> vector<2x32xf32>
    %c0_3 = arith.constant 0 : index
    %c0_4 = arith.constant 0 : index
    %4 = vector.load %arg3[%c0_3, %c0_4] : memref<1x32xf32, #tpu.memory_space<vmem>>, vector<1x32xf32>
    %5 = vector.broadcast %4 : vector<1x32xf32> to vector<2x32xf32>
    %6 = arith.addf %3, %5 : vector<2x32xf32>
    %7 = math.tanh %6 : vector<2x32xf32>
    %c0_5 = arith.constant 0 : index
    %c0_6 = arith.constant 0 : index
    %8 = vector.load %arg4[%c0_5, %c0_6] : memref<2x32xf32, #tpu.memory_space<vmem>>, vector<2x32xf32>
    tpu.vector_store %arg4[%c0_5, %c0_6], %7 {strides = array<i32>} : memref<2x32xf32, #tpu.memory_space<vmem>>, vector<2x32xf32>,
    return
  }
  func.func @transform_0(%arg0: i32) -> (i32, i32) {
    %c0_i32 = arith.constant 0 : i32
    %c0_i32_0 = arith.constant 0 : i32
    %c0_i32_1 = arith.constant 0 : i32
    return %c0_i32, %c0_i32_0 : i32, i32
  }
  func.func @transform_1(%arg0: i32) -> (i32, i32) {
    %c0_i32 = arith.constant 0 : i32
    %c0_i32_0 = arith.constant 0 : i32
    %c0_i32_1 = arith.constant 0 : i32
    return %c0_i32, %c0_i32_0 : i32, i32
  }
  func.func @transform_2(%arg0: i32) -> (i32, i32) {
    %c0_i32 = arith.constant 0 : i32
    %c0_i32_0 = arith.constant 0 : i32
    %c0_i32_1 = arith.constant 0 : i32
    return %c0_i32, %c0_i32_0 : i32, i32
  }
  func.func @transform_3(%arg0: i32) -> (i32, i32) {
    %c0_i32 = arith.constant 0 : i32
    %c0_i32_0 = arith.constant 0 : i32
    %c0_i32_1 = arith.constant 0 : i32
    return %c0_i32, %c0_i32_0 : i32, i32
  }
}

module attributes {stable_mosaic.version = 11 : i64} {
  func.func @_encoder_kernel(%arg0: i32, %arg1: i32, %arg2: memref<1x8x32xf32, #tpu.memory_space<vmem>>, %arg3: memref<1x1x8xf32, #tpu.memory_space<vmem>>, %arg4: memref<1x32xf32, #tpu.memory_space<vmem>>, %arg5: memref<1x32xf32, #tpu.memory_space<vmem>>, %arg6: memref<1x32x96xbf16, #tpu.memory_space<vmem>>, %arg7: memref<1x1x96xf32, #tpu.memory_space<vmem>>, %arg8: memref<1x32x32xbf16, #tpu.memory_space<vmem>>, %arg9: memref<1x1x32xf32, #tpu.memory_space<vmem>>, %arg10: memref<1x1x32xf32, #tpu.memory_space<vmem>>, %arg11: memref<1x1x32xf32, #tpu.memory_space<vmem>>, %arg12: memref<1x32x64xbf16, #tpu.memory_space<vmem>>, %arg13: memref<1x1x64xf32, #tpu.memory_space<vmem>>, %arg14: memref<1x64x32xbf16, #tpu.memory_space<vmem>>, %arg15: memref<1x1x32xf32, #tpu.memory_space<vmem>>, %arg16: memref<1x1x32xf32, #tpu.memory_space<vmem>>, %arg17: memref<1x1x32xf32, #tpu.memory_space<vmem>>, %arg18: memref<1x8x32xf32, #tpu.memory_space<vmem>>) attributes {dimension_semantics = [#tpu.dimension_semantics<parallel>, #tpu.dimension_semantics<arbitrary>], iteration_bounds = array<i64: 2, 2>, scalar_prefetch = 0 : i64, scratch_operands = 0 : i64, tpu.core_type = #tpu.core_type<tc>, window_params = [{transform_indices = @transform_0, window_bounds = array<i64: 1, 8, 32>}, {transform_indices = @transform_1, window_bounds = array<i64: 1, 1, 8>}, {pipeline_mode = #tpu.pipeline_mode<synchronous>, transform_indices = @transform_2, window_bounds = array<i64: 1, 32>}, {pipeline_mode = #tpu.pipeline_mode<synchronous>, transform_indices = @transform_3, window_bounds = array<i64: 1, 32>}, {transform_indices = @transform_4, window_bounds = array<i64: 1, 32, 96>}, {transform_indices = @transform_5, window_bounds = array<i64: 1, 1, 96>}, {transform_indices = @transform_6, window_bounds = array<i64: 1, 32, 32>}, {transform_indices = @transform_7, window_bounds = array<i64: 1, 1, 32>}, {transform_indices = @transform_8, window_bounds = array<i64: 1, 1, 32>}, {transform_indices = @transform_9, window_bounds = array<i64: 1, 1, 32>}, {transform_indices = @transform_10, window_bounds = array<i64: 1, 32, 64>}, {transform_indices = @transform_11, window_bounds = array<i64: 1, 1, 64>}, {transform_indices = @transform_12, window_bounds = array<i64: 1, 64, 32>}, {transform_indices = @transform_13, window_bounds = array<i64: 1, 1, 32>}, {transform_indices = @transform_14, window_bounds = array<i64: 1, 1, 32>}, {transform_indices = @transform_15, window_bounds = array<i64: 1, 1, 32>}, {transform_indices = @transform_16, window_bounds = array<i64: 1, 8, 32>}]} {
    %c0_i32 = arith.constant 0 : i32
    %0 = arith.cmpi eq, %arg1, %c0_i32 : i32
    %1 = arith.extui %0 : i1 to i32
    %c0_i32_0 = arith.constant 0 : i32
    %2 = arith.cmpi ne, %1, %c0_i32_0 : i32
    scf.if %2 {
      %c0_86 = arith.constant 0 : index
      %c0_87 = arith.constant 0 : index
      %c0_88 = arith.constant 0 : index
      %215 = vector.load %arg2[%c0_86, %c0_87, %c0_88] : memref<1x8x32xf32, #tpu.memory_space<vmem>>, vector<1x8x32xf32>
      %216 = vector.shape_cast %215 : vector<1x8x32xf32> to vector<8x32xf32>
      %c0_89 = arith.constant 0 : index
      %c0_90 = arith.constant 0 : index
      %217 = vector.load %arg4[%c0_89, %c0_90] : memref<1x32xf32, #tpu.memory_space<vmem>>, vector<1x32xf32>
      %c0_91 = arith.constant 0 : index
      %c0_92 = arith.constant 0 : index
      %218 = vector.load %arg5[%c0_91, %c0_92] : memref<1x32xf32, #tpu.memory_space<vmem>>, vector<1x32xf32>
      %cst_93 = arith.constant dense<0.000000e+00> : vector<8xf32>
      %219 = vector.multi_reduction <add>, %216, %cst_93 [1] : vector<8x32xf32> to vector<8xf32>
      %220 = vector.shape_cast %219 : vector<8xf32> to vector<8x1xf32>
      %cst_94 = arith.constant 3.200000e+01 : f32
      %221 = vector.broadcast %cst_94 : f32 to vector<8x1xf32>
      %222 = arith.divf %220, %221 : vector<8x1xf32>
      %223 = vector.broadcast %222 : vector<8x1xf32> to vector<8x32xf32>
      %224 = arith.subf %216, %223 : vector<8x32xf32>
      %225 = arith.mulf %224, %224 : vector<8x32xf32>
      %cst_95 = arith.constant dense<0.000000e+00> : vector<8xf32>
      %226 = vector.multi_reduction <add>, %225, %cst_95 [1] : vector<8x32xf32> to vector<8xf32>
      %227 = vector.shape_cast %226 : vector<8xf32> to vector<8x1xf32>
      %cst_96 = arith.constant 3.200000e+01 : f32
      %228 = vector.broadcast %cst_96 : f32 to vector<8x1xf32>
      %229 = arith.divf %227, %228 : vector<8x1xf32>
      %cst_97 = arith.constant 9.99999996E-13 : f32
      %230 = vector.broadcast %cst_97 : f32 to vector<8x1xf32>
      %231 = arith.addf %229, %230 : vector<8x1xf32>
      %232 = math.rsqrt %231 : vector<8x1xf32>
      %233 = vector.broadcast %232 : vector<8x1xf32> to vector<8x32xf32>
      %234 = arith.mulf %224, %233 : vector<8x32xf32>
      %235 = vector.broadcast %217 : vector<1x32xf32> to vector<8x32xf32>
      %236 = arith.mulf %234, %235 : vector<8x32xf32>
      %237 = vector.broadcast %218 : vector<1x32xf32> to vector<8x32xf32>
      %238 = arith.addf %236, %237 : vector<8x32xf32>
      %c0_98 = arith.constant 0 : index
      %c0_99 = arith.constant 0 : index
      %c0_100 = arith.constant 0 : index
      %239 = vector.load %arg18[%c0_98, %c0_99, %c0_100] : memref<1x8x32xf32, #tpu.memory_space<vmem>>, vector<1x8x32xf32>
      %240 = vector.shape_cast %239 : vector<1x8x32xf32> to vector<8x32xf32>
      %241 = vector.shape_cast %238 : vector<8x32xf32> to vector<1x8x32xf32>
      tpu.vector_store %arg18[%c0_98, %c0_99, %c0_100], %241 {strides = array<i32>} : memref<1x8x32xf32, #tpu.memory_space<vmem>>, vector<1x8x32xf32>,
    } else {
    }
    %c0 = arith.constant 0 : index
    %c0_1 = arith.constant 0 : index
    %c0_2 = arith.constant 0 : index
    %3 = vector.load %arg18[%c0, %c0_1, %c0_2] : memref<1x8x32xf32, #tpu.memory_space<vmem>>, vector<1x8x32xf32>
    %4 = vector.shape_cast %3 : vector<1x8x32xf32> to vector<8x32xf32>
    %c0_3 = arith.constant 0 : index
    %c0_4 = arith.constant 0 : index
    %c0_5 = arith.constant 0 : index
    %5 = vector.load %arg3[%c0_3, %c0_4, %c0_5] : memref<1x1x8xf32, #tpu.memory_space<vmem>>, vector<1x1x8xf32>
    %6 = vector.shape_cast %5 : vector<1x1x8xf32> to vector<1x8xf32>
    %7 = arith.truncf %4 : vector<8x32xf32> to vector<8x32xbf16>
    %c0_6 = arith.constant 0 : index
    %c0_7 = arith.constant 0 : index
    %c0_8 = arith.constant 0 : index
    %8 = vector.load %arg6[%c0_6, %c0_7, %c0_8] : memref<1x32x96xbf16, #tpu.memory_space<vmem>>, vector<1x32x96xbf16>
    %9 = vector.shape_cast %8 : vector<1x32x96xbf16> to vector<32x96xbf16>
    %cst = arith.constant dense<0.000000e+00> : vector<8x96xf32>
    %10 = tpu.matmul %7, %9, %cst {dimension_numbers = #tpu.dot_dimension_numbers<[1], [0], [0], [1], [0, 0, 1, 1], [], []>} : vector<8x32xbf16>, vector<32x96xbf16>, vector<8x96xf32> -> vector<8x96xf32>
    %c0_9 = arith.constant 0 : index
    %c0_10 = arith.constant 0 : index
    %c0_11 = arith.constant 0 : index
    %11 = vector.load %arg7[%c0_9, %c0_10, %c0_11] : memref<1x1x96xf32, #tpu.memory_space<vmem>>, vector<1x1x96xf32>
    %12 = vector.shape_cast %11 : vector<1x1x96xf32> to vector<1x96xf32>
    %13 = vector.broadcast %12 : vector<1x96xf32> to vector<8x96xf32>
    %14 = arith.addf %10, %13 : vector<8x96xf32>
    %15 = vector.extract_strided_slice %14 {offsets = [0, 0], sizes = [8, 32], strides = [1, 1]} : vector<8x96xf32> to vector<8x32xf32>
    %16 = vector.extract_strided_slice %14 {offsets = [0, 32], sizes = [8, 32], strides = [1, 1]} : vector<8x96xf32> to vector<8x32xf32>
    %17 = vector.extract_strided_slice %14 {offsets = [0, 64], sizes = [8, 32], strides = [1, 1]} : vector<8x96xf32> to vector<8x32xf32>
    %c0_12 = arith.constant 0 : index
    %c0_13 = arith.constant 0 : index
    %c0_14 = arith.constant 0 : index
    %18 = vector.load %arg8[%c0_12, %c0_13, %c0_14] : memref<1x32x32xbf16, #tpu.memory_space<vmem>>, vector<1x32x32xbf16>
    %19 = vector.shape_cast %18 : vector<1x32x32xbf16> to vector<32x32xbf16>
    %cst_15 = arith.constant 0.000000e+00 : f32
    %20 = vector.broadcast %cst_15 : f32 to vector<8x32xf32>
    %21 = vector.extract_strided_slice %15 {offsets = [0, 0], sizes = [8, 8], strides = [1, 1]} : vector<8x32xf32> to vector<8x8xf32>
    %22 = arith.truncf %21 : vector<8x8xf32> to vector<8x8xbf16>
    %23 = vector.extract_strided_slice %16 {offsets = [0, 0], sizes = [8, 8], strides = [1, 1]} : vector<8x32xf32> to vector<8x8xf32>
    %24 = arith.truncf %23 : vector<8x8xf32> to vector<8x8xbf16>
    %25 = vector.extract_strided_slice %17 {offsets = [0, 0], sizes = [8, 8], strides = [1, 1]} : vector<8x32xf32> to vector<8x8xf32>
    %26 = arith.truncf %25 : vector<8x8xf32> to vector<8x8xbf16>
    "tpu.trace_start"() <{level = 10 : i32, message = "qd,kd->qk"}> : () -> ()
    %cst_16 = arith.constant dense<0.000000e+00> : vector<8x8xf32>
    %27 = tpu.matmul %22, %24, %cst_16 {dimension_numbers = #tpu.dot_dimension_numbers<[1], [1], [0], [0], [0, 0, 1, 0], [], []>} : vector<8x8xbf16>, vector<8x8xbf16>, vector<8x8xf32> -> vector<8x8xf32>
    "tpu.trace_stop"() : () -> ()
    %cst_17 = arith.constant 0.353553385 : f32
    %28 = vector.broadcast %cst_17 : f32 to vector<8x8xf32>
    %29 = arith.mulf %27, %28 : vector<8x8xf32>
    %30 = vector.broadcast %6 : vector<1x8xf32> to vector<8x8xf32>
    %31 = arith.addf %29, %30 : vector<8x8xf32>
    %cst_18 = arith.constant dense<0xFF800000> : vector<8xf32>
    %32 = vector.multi_reduction <maximumf>, %31, %cst_18 [1] : vector<8x8xf32> to vector<8xf32>
    %33 = vector.shape_cast %32 : vector<8xf32> to vector<8x1xf32>
    %34 = vector.broadcast %33 : vector<8x1xf32> to vector<8x8xf32>
    %35 = arith.subf %31, %34 : vector<8x8xf32>
    %36 = math.exp %35 : vector<8x8xf32>
    %cst_19 = arith.constant dense<0.000000e+00> : vector<8xf32>
    %37 = vector.multi_reduction <add>, %36, %cst_19 [1] : vector<8x8xf32> to vector<8xf32>
    %38 = vector.shape_cast %37 : vector<8xf32> to vector<8x1xf32>
    %39 = tpu.reciprocal %38 {approx = true} : vector<8x1xf32> -> vector<8x1xf32>
    %40 = vector.broadcast %39 : vector<8x1xf32> to vector<8x8xf32>
    %41 = arith.mulf %36, %40 : vector<8x8xf32>
    %42 = arith.truncf %41 : vector<8x8xf32> to vector<8x8xbf16>
    %cst_20 = arith.constant dense<0.000000e+00> : vector<8x8xf32>
    %43 = tpu.matmul %42, %26, %cst_20 {dimension_numbers = #tpu.dot_dimension_numbers<[1], [0], [0], [1], [0, 0, 1, 1], [], []>} : vector<8x8xbf16>, vector<8x8xbf16>, vector<8x8xf32> -> vector<8x8xf32>
    %44 = arith.truncf %43 : vector<8x8xf32> to vector<8x8xbf16>
    %45 = vector.extract_strided_slice %19 {offsets = [0, 0], sizes = [8, 32], strides = [1, 1]} : vector<32x32xbf16> to vector<8x32xbf16>
    %cst_21 = arith.constant dense<0.000000e+00> : vector<8x32xf32>
    %46 = tpu.matmul %44, %45, %cst_21 {dimension_numbers = #tpu.dot_dimension_numbers<[1], [0], [0], [1], [0, 0, 1, 1], [], []>} : vector<8x8xbf16>, vector<8x32xbf16>, vector<8x32xf32> -> vector<8x32xf32>
    %47 = arith.addf %20, %46 : vector<8x32xf32>
    %48 = vector.extract_strided_slice %15 {offsets = [0, 8], sizes = [8, 8], strides = [1, 1]} : vector<8x32xf32> to vector<8x8xf32>
    %49 = arith.truncf %48 : vector<8x8xf32> to vector<8x8xbf16>
    %50 = vector.extract_strided_slice %16 {offsets = [0, 8], sizes = [8, 8], strides = [1, 1]} : vector<8x32xf32> to vector<8x8xf32>
    %51 = arith.truncf %50 : vector<8x8xf32> to vector<8x8xbf16>
    %52 = vector.extract_strided_slice %17 {offsets = [0, 8], sizes = [8, 8], strides = [1, 1]} : vector<8x32xf32> to vector<8x8xf32>
    %53 = arith.truncf %52 : vector<8x8xf32> to vector<8x8xbf16>
    "tpu.trace_start"() <{level = 10 : i32, message = "qd,kd->qk"}> : () -> ()
    %cst_22 = arith.constant dense<0.000000e+00> : vector<8x8xf32>
    %54 = tpu.matmul %49, %51, %cst_22 {dimension_numbers = #tpu.dot_dimension_numbers<[1], [1], [0], [0], [0, 0, 1, 0], [], []>} : vector<8x8xbf16>, vector<8x8xbf16>, vector<8x8xf32> -> vector<8x8xf32>
    "tpu.trace_stop"() : () -> ()
    %cst_23 = arith.constant 0.353553385 : f32
    %55 = vector.broadcast %cst_23 : f32 to vector<8x8xf32>
    %56 = arith.mulf %54, %55 : vector<8x8xf32>
    %57 = vector.broadcast %6 : vector<1x8xf32> to vector<8x8xf32>
    %58 = arith.addf %56, %57 : vector<8x8xf32>
    %cst_24 = arith.constant dense<0xFF800000> : vector<8xf32>
    %59 = vector.multi_reduction <maximumf>, %58, %cst_24 [1] : vector<8x8xf32> to vector<8xf32>
    %60 = vector.shape_cast %59 : vector<8xf32> to vector<8x1xf32>
    %61 = vector.broadcast %60 : vector<8x1xf32> to vector<8x8xf32>
    %62 = arith.subf %58, %61 : vector<8x8xf32>
    %63 = math.exp %62 : vector<8x8xf32>
    %cst_25 = arith.constant dense<0.000000e+00> : vector<8xf32>
    %64 = vector.multi_reduction <add>, %63, %cst_25 [1] : vector<8x8xf32> to vector<8xf32>
    %65 = vector.shape_cast %64 : vector<8xf32> to vector<8x1xf32>
    %66 = tpu.reciprocal %65 {approx = true} : vector<8x1xf32> -> vector<8x1xf32>
    %67 = vector.broadcast %66 : vector<8x1xf32> to vector<8x8xf32>
    %68 = arith.mulf %63, %67 : vector<8x8xf32>
    %69 = arith.truncf %68 : vector<8x8xf32> to vector<8x8xbf16>
    %cst_26 = arith.constant dense<0.000000e+00> : vector<8x8xf32>
    %70 = tpu.matmul %69, %53, %cst_26 {dimension_numbers = #tpu.dot_dimension_numbers<[1], [0], [0], [1], [0, 0, 1, 1], [], []>} : vector<8x8xbf16>, vector<8x8xbf16>, vector<8x8xf32> -> vector<8x8xf32>
    %71 = arith.truncf %70 : vector<8x8xf32> to vector<8x8xbf16>
    %72 = vector.extract_strided_slice %19 {offsets = [8, 0], sizes = [8, 32], strides = [1, 1]} : vector<32x32xbf16> to vector<8x32xbf16>
    %cst_27 = arith.constant dense<0.000000e+00> : vector<8x32xf32>
    %73 = tpu.matmul %71, %72, %cst_27 {dimension_numbers = #tpu.dot_dimension_numbers<[1], [0], [0], [1], [0, 0, 1, 1], [], []>} : vector<8x8xbf16>, vector<8x32xbf16>, vector<8x32xf32> -> vector<8x32xf32>
    %74 = arith.addf %47, %73 : vector<8x32xf32>
    %75 = vector.extract_strided_slice %15 {offsets = [0, 16], sizes = [8, 8], strides = [1, 1]} : vector<8x32xf32> to vector<8x8xf32>
    %76 = arith.truncf %75 : vector<8x8xf32> to vector<8x8xbf16>
    %77 = vector.extract_strided_slice %16 {offsets = [0, 16], sizes = [8, 8], strides = [1, 1]} : vector<8x32xf32> to vector<8x8xf32>
    %78 = arith.truncf %77 : vector<8x8xf32> to vector<8x8xbf16>
    %79 = vector.extract_strided_slice %17 {offsets = [0, 16], sizes = [8, 8], strides = [1, 1]} : vector<8x32xf32> to vector<8x8xf32>
    %80 = arith.truncf %79 : vector<8x8xf32> to vector<8x8xbf16>
    "tpu.trace_start"() <{level = 10 : i32, message = "qd,kd->qk"}> : () -> ()
    %cst_28 = arith.constant dense<0.000000e+00> : vector<8x8xf32>
    %81 = tpu.matmul %76, %78, %cst_28 {dimension_numbers = #tpu.dot_dimension_numbers<[1], [1], [0], [0], [0, 0, 1, 0], [], []>} : vector<8x8xbf16>, vector<8x8xbf16>, vector<8x8xf32> -> vector<8x8xf32>
    "tpu.trace_stop"() : () -> ()
    %cst_29 = arith.constant 0.353553385 : f32
    %82 = vector.broadcast %cst_29 : f32 to vector<8x8xf32>
    %83 = arith.mulf %81, %82 : vector<8x8xf32>
    %84 = vector.broadcast %6 : vector<1x8xf32> to vector<8x8xf32>
    %85 = arith.addf %83, %84 : vector<8x8xf32>
    %cst_30 = arith.constant dense<0xFF800000> : vector<8xf32>
    %86 = vector.multi_reduction <maximumf>, %85, %cst_30 [1] : vector<8x8xf32> to vector<8xf32>
    %87 = vector.shape_cast %86 : vector<8xf32> to vector<8x1xf32>
    %88 = vector.broadcast %87 : vector<8x1xf32> to vector<8x8xf32>
    %89 = arith.subf %85, %88 : vector<8x8xf32>
    %90 = math.exp %89 : vector<8x8xf32>
    %cst_31 = arith.constant dense<0.000000e+00> : vector<8xf32>
    %91 = vector.multi_reduction <add>, %90, %cst_31 [1] : vector<8x8xf32> to vector<8xf32>
    %92 = vector.shape_cast %91 : vector<8xf32> to vector<8x1xf32>
    %93 = tpu.reciprocal %92 {approx = true} : vector<8x1xf32> -> vector<8x1xf32>
    %94 = vector.broadcast %93 : vector<8x1xf32> to vector<8x8xf32>
    %95 = arith.mulf %90, %94 : vector<8x8xf32>
    %96 = arith.truncf %95 : vector<8x8xf32> to vector<8x8xbf16>
    %cst_32 = arith.constant dense<0.000000e+00> : vector<8x8xf32>
    %97 = tpu.matmul %96, %80, %cst_32 {dimension_numbers = #tpu.dot_dimension_numbers<[1], [0], [0], [1], [0, 0, 1, 1], [], []>} : vector<8x8xbf16>, vector<8x8xbf16>, vector<8x8xf32> -> vector<8x8xf32>
    %98 = arith.truncf %97 : vector<8x8xf32> to vector<8x8xbf16>
    %99 = vector.extract_strided_slice %19 {offsets = [16, 0], sizes = [8, 32], strides = [1, 1]} : vector<32x32xbf16> to vector<8x32xbf16>
    %cst_33 = arith.constant dense<0.000000e+00> : vector<8x32xf32>
    %100 = tpu.matmul %98, %99, %cst_33 {dimension_numbers = #tpu.dot_dimension_numbers<[1], [0], [0], [1], [0, 0, 1, 1], [], []>} : vector<8x8xbf16>, vector<8x32xbf16>, vector<8x32xf32> -> vector<8x32xf32>
    %101 = arith.addf %74, %100 : vector<8x32xf32>
    %102 = vector.extract_strided_slice %15 {offsets = [0, 24], sizes = [8, 8], strides = [1, 1]} : vector<8x32xf32> to vector<8x8xf32>
    %103 = arith.truncf %102 : vector<8x8xf32> to vector<8x8xbf16>
    %104 = vector.extract_strided_slice %16 {offsets = [0, 24], sizes = [8, 8], strides = [1, 1]} : vector<8x32xf32> to vector<8x8xf32>
    %105 = arith.truncf %104 : vector<8x8xf32> to vector<8x8xbf16>
    %106 = vector.extract_strided_slice %17 {offsets = [0, 24], sizes = [8, 8], strides = [1, 1]} : vector<8x32xf32> to vector<8x8xf32>
    %107 = arith.truncf %106 : vector<8x8xf32> to vector<8x8xbf16>
    "tpu.trace_start"() <{level = 10 : i32, message = "qd,kd->qk"}> : () -> ()
    %cst_34 = arith.constant dense<0.000000e+00> : vector<8x8xf32>
    %108 = tpu.matmul %103, %105, %cst_34 {dimension_numbers = #tpu.dot_dimension_numbers<[1], [1], [0], [0], [0, 0, 1, 0], [], []>} : vector<8x8xbf16>, vector<8x8xbf16>, vector<8x8xf32> -> vector<8x8xf32>
    "tpu.trace_stop"() : () -> ()
    %cst_35 = arith.constant 0.353553385 : f32
    %109 = vector.broadcast %cst_35 : f32 to vector<8x8xf32>
    %110 = arith.mulf %108, %109 : vector<8x8xf32>
    %111 = vector.broadcast %6 : vector<1x8xf32> to vector<8x8xf32>
    %112 = arith.addf %110, %111 : vector<8x8xf32>
    %cst_36 = arith.constant dense<0xFF800000> : vector<8xf32>
    %113 = vector.multi_reduction <maximumf>, %112, %cst_36 [1] : vector<8x8xf32> to vector<8xf32>
    %114 = vector.shape_cast %113 : vector<8xf32> to vector<8x1xf32>
    %115 = vector.broadcast %114 : vector<8x1xf32> to vector<8x8xf32>
    %116 = arith.subf %112, %115 : vector<8x8xf32>
    %117 = math.exp %116 : vector<8x8xf32>
    %cst_37 = arith.constant dense<0.000000e+00> : vector<8xf32>
    %118 = vector.multi_reduction <add>, %117, %cst_37 [1] : vector<8x8xf32> to vector<8xf32>
    %119 = vector.shape_cast %118 : vector<8xf32> to vector<8x1xf32>
    %120 = tpu.reciprocal %119 {approx = true} : vector<8x1xf32> -> vector<8x1xf32>
    %121 = vector.broadcast %120 : vector<8x1xf32> to vector<8x8xf32>
    %122 = arith.mulf %117, %121 : vector<8x8xf32>
    %123 = arith.truncf %122 : vector<8x8xf32> to vector<8x8xbf16>
    %cst_38 = arith.constant dense<0.000000e+00> : vector<8x8xf32>
    %124 = tpu.matmul %123, %107, %cst_38 {dimension_numbers = #tpu.dot_dimension_numbers<[1], [0], [0], [1], [0, 0, 1, 1], [], []>} : vector<8x8xbf16>, vector<8x8xbf16>, vector<8x8xf32> -> vector<8x8xf32>
    %125 = arith.truncf %124 : vector<8x8xf32> to vector<8x8xbf16>
    %126 = vector.extract_strided_slice %19 {offsets = [24, 0], sizes = [8, 32], strides = [1, 1]} : vector<32x32xbf16> to vector<8x32xbf16>
    %cst_39 = arith.constant dense<0.000000e+00> : vector<8x32xf32>
    %127 = tpu.matmul %125, %126, %cst_39 {dimension_numbers = #tpu.dot_dimension_numbers<[1], [0], [0], [1], [0, 0, 1, 1], [], []>} : vector<8x8xbf16>, vector<8x32xbf16>, vector<8x32xf32> -> vector<8x32xf32>
    %128 = arith.addf %101, %127 : vector<8x32xf32>
    %c0_40 = arith.constant 0 : index
    %c0_41 = arith.constant 0 : index
    %c0_42 = arith.constant 0 : index
    %129 = vector.load %arg9[%c0_40, %c0_41, %c0_42] : memref<1x1x32xf32, #tpu.memory_space<vmem>>, vector<1x1x32xf32>
    %130 = vector.shape_cast %129 : vector<1x1x32xf32> to vector<1x32xf32>
    %131 = vector.broadcast %130 : vector<1x32xf32> to vector<8x32xf32>
    %132 = arith.addf %128, %131 : vector<8x32xf32>
    %133 = arith.addf %132, %4 : vector<8x32xf32>
    %c0_43 = arith.constant 0 : index
    %c0_44 = arith.constant 0 : index
    %c0_45 = arith.constant 0 : index
    %134 = vector.load %arg10[%c0_43, %c0_44, %c0_45] : memref<1x1x32xf32, #tpu.memory_space<vmem>>, vector<1x1x32xf32>
    %135 = vector.shape_cast %134 : vector<1x1x32xf32> to vector<1x32xf32>
    %c0_46 = arith.constant 0 : index
    %c0_47 = arith.constant 0 : index
    %c0_48 = arith.constant 0 : index
    %136 = vector.load %arg11[%c0_46, %c0_47, %c0_48] : memref<1x1x32xf32, #tpu.memory_space<vmem>>, vector<1x1x32xf32>
    %137 = vector.shape_cast %136 : vector<1x1x32xf32> to vector<1x32xf32>
    %cst_49 = arith.constant dense<0.000000e+00> : vector<8xf32>
    %138 = vector.multi_reduction <add>, %133, %cst_49 [1] : vector<8x32xf32> to vector<8xf32>
    %139 = vector.shape_cast %138 : vector<8xf32> to vector<8x1xf32>
    %cst_50 = arith.constant 3.200000e+01 : f32
    %140 = vector.broadcast %cst_50 : f32 to vector<8x1xf32>
    %141 = arith.divf %139, %140 : vector<8x1xf32>
    %142 = vector.broadcast %141 : vector<8x1xf32> to vector<8x32xf32>
    %143 = arith.subf %133, %142 : vector<8x32xf32>
    %144 = arith.mulf %143, %143 : vector<8x32xf32>
    %cst_51 = arith.constant dense<0.000000e+00> : vector<8xf32>
    %145 = vector.multi_reduction <add>, %144, %cst_51 [1] : vector<8x32xf32> to vector<8xf32>
    %146 = vector.shape_cast %145 : vector<8xf32> to vector<8x1xf32>
    %cst_52 = arith.constant 3.200000e+01 : f32
    %147 = vector.broadcast %cst_52 : f32 to vector<8x1xf32>
    %148 = arith.divf %146, %147 : vector<8x1xf32>
    %cst_53 = arith.constant 9.99999996E-13 : f32
    %149 = vector.broadcast %cst_53 : f32 to vector<8x1xf32>
    %150 = arith.addf %148, %149 : vector<8x1xf32>
    %151 = math.rsqrt %150 : vector<8x1xf32>
    %152 = vector.broadcast %151 : vector<8x1xf32> to vector<8x32xf32>
    %153 = arith.mulf %143, %152 : vector<8x32xf32>
    %154 = vector.broadcast %135 : vector<1x32xf32> to vector<8x32xf32>
    %155 = arith.mulf %153, %154 : vector<8x32xf32>
    %156 = vector.broadcast %137 : vector<1x32xf32> to vector<8x32xf32>
    %157 = arith.addf %155, %156 : vector<8x32xf32>
    %158 = arith.truncf %157 : vector<8x32xf32> to vector<8x32xbf16>
    %c0_54 = arith.constant 0 : index
    %c0_55 = arith.constant 0 : index
    %c0_56 = arith.constant 0 : index
    %159 = vector.load %arg12[%c0_54, %c0_55, %c0_56] : memref<1x32x64xbf16, #tpu.memory_space<vmem>>, vector<1x32x64xbf16>
    %160 = vector.shape_cast %159 : vector<1x32x64xbf16> to vector<32x64xbf16>
    %cst_57 = arith.constant dense<0.000000e+00> : vector<8x64xf32>
    %161 = tpu.matmul %158, %160, %cst_57 {dimension_numbers = #tpu.dot_dimension_numbers<[1], [0], [0], [1], [0, 0, 1, 1], [], []>} : vector<8x32xbf16>, vector<32x64xbf16>, vector<8x64xf32> -> vector<8x64xf32>
    %c0_58 = arith.constant 0 : index
    %c0_59 = arith.constant 0 : index
    %c0_60 = arith.constant 0 : index
    %162 = vector.load %arg13[%c0_58, %c0_59, %c0_60] : memref<1x1x64xf32, #tpu.memory_space<vmem>>, vector<1x1x64xf32>
    %163 = vector.shape_cast %162 : vector<1x1x64xf32> to vector<1x64xf32>
    %164 = vector.broadcast %163 : vector<1x64xf32> to vector<8x64xf32>
    %165 = arith.addf %161, %164 : vector<8x64xf32>
    %166 = arith.mulf %165, %165 : vector<8x64xf32>
    %167 = arith.mulf %165, %166 : vector<8x64xf32>
    %cst_61 = arith.constant 4.471500e-02 : f32
    %168 = vector.broadcast %cst_61 : f32 to vector<8x64xf32>
    %169 = arith.mulf %168, %167 : vector<8x64xf32>
    %170 = arith.addf %165, %169 : vector<8x64xf32>
    %cst_62 = arith.constant 0.797884583 : f32
    %171 = vector.broadcast %cst_62 : f32 to vector<8x64xf32>
    %172 = arith.mulf %171, %170 : vector<8x64xf32>
    %173 = math.tanh %172 : vector<8x64xf32>
    %cst_63 = arith.constant 1.000000e+00 : f32
    %174 = vector.broadcast %cst_63 : f32 to vector<8x64xf32>
    %175 = arith.addf %174, %173 : vector<8x64xf32>
    %cst_64 = arith.constant 5.000000e-01 : f32
    %176 = vector.broadcast %cst_64 : f32 to vector<8x64xf32>
    %177 = arith.mulf %176, %175 : vector<8x64xf32>
    %178 = arith.mulf %165, %177 : vector<8x64xf32>
    %179 = arith.truncf %178 : vector<8x64xf32> to vector<8x64xbf16>
    %c0_65 = arith.constant 0 : index
    %c0_66 = arith.constant 0 : index
    %c0_67 = arith.constant 0 : index
    %180 = vector.load %arg14[%c0_65, %c0_66, %c0_67] : memref<1x64x32xbf16, #tpu.memory_space<vmem>>, vector<1x64x32xbf16>
    %181 = vector.shape_cast %180 : vector<1x64x32xbf16> to vector<64x32xbf16>
    %cst_68 = arith.constant dense<0.000000e+00> : vector<8x32xf32>
    %182 = tpu.matmul %179, %181, %cst_68 {dimension_numbers = #tpu.dot_dimension_numbers<[1], [0], [0], [1], [0, 0, 1, 1], [], []>} : vector<8x64xbf16>, vector<64x32xbf16>, vector<8x32xf32> -> vector<8x32xf32>
    %c0_69 = arith.constant 0 : index
    %c0_70 = arith.constant 0 : index
    %c0_71 = arith.constant 0 : index
    %183 = vector.load %arg15[%c0_69, %c0_70, %c0_71] : memref<1x1x32xf32, #tpu.memory_space<vmem>>, vector<1x1x32xf32>
    %184 = vector.shape_cast %183 : vector<1x1x32xf32> to vector<1x32xf32>
    %185 = vector.broadcast %184 : vector<1x32xf32> to vector<8x32xf32>
    %186 = arith.addf %182, %185 : vector<8x32xf32>
    %187 = arith.addf %186, %157 : vector<8x32xf32>
    %c0_72 = arith.constant 0 : index
    %c0_73 = arith.constant 0 : index
    %c0_74 = arith.constant 0 : index
    %188 = vector.load %arg16[%c0_72, %c0_73, %c0_74] : memref<1x1x32xf32, #tpu.memory_space<vmem>>, vector<1x1x32xf32>
    %189 = vector.shape_cast %188 : vector<1x1x32xf32> to vector<1x32xf32>
    %c0_75 = arith.constant 0 : index
    %c0_76 = arith.constant 0 : index
    %c0_77 = arith.constant 0 : index
    %190 = vector.load %arg17[%c0_75, %c0_76, %c0_77] : memref<1x1x32xf32, #tpu.memory_space<vmem>>, vector<1x1x32xf32>
    %191 = vector.shape_cast %190 : vector<1x1x32xf32> to vector<1x32xf32>
    %cst_78 = arith.constant dense<0.000000e+00> : vector<8xf32>
    %192 = vector.multi_reduction <add>, %187, %cst_78 [1] : vector<8x32xf32> to vector<8xf32>
    %193 = vector.shape_cast %192 : vector<8xf32> to vector<8x1xf32>
    %cst_79 = arith.constant 3.200000e+01 : f32
    %194 = vector.broadcast %cst_79 : f32 to vector<8x1xf32>
    %195 = arith.divf %193, %194 : vector<8x1xf32>
    %196 = vector.broadcast %195 : vector<8x1xf32> to vector<8x32xf32>
    %197 = arith.subf %187, %196 : vector<8x32xf32>
    %198 = arith.mulf %197, %197 : vector<8x32xf32>
    %cst_80 = arith.constant dense<0.000000e+00> : vector<8xf32>
    %199 = vector.multi_reduction <add>, %198, %cst_80 [1] : vector<8x32xf32> to vector<8xf32>
    %200 = vector.shape_cast %199 : vector<8xf32> to vector<8x1xf32>
    %cst_81 = arith.constant 3.200000e+01 : f32
    %201 = vector.broadcast %cst_81 : f32 to vector<8x1xf32>
    %202 = arith.divf %200, %201 : vector<8x1xf32>
    %cst_82 = arith.constant 9.99999996E-13 : f32
    %203 = vector.broadcast %cst_82 : f32 to vector<8x1xf32>
    %204 = arith.addf %202, %203 : vector<8x1xf32>
    %205 = math.rsqrt %204 : vector<8x1xf32>
    %206 = vector.broadcast %205 : vector<8x1xf32> to vector<8x32xf32>
    %207 = arith.mulf %197, %206 : vector<8x32xf32>
    %208 = vector.broadcast %189 : vector<1x32xf32> to vector<8x32xf32>
    %209 = arith.mulf %207, %208 : vector<8x32xf32>
    %210 = vector.broadcast %191 : vector<1x32xf32> to vector<8x32xf32>
    %211 = arith.addf %209, %210 : vector<8x32xf32>
    %c0_83 = arith.constant 0 : index
    %c0_84 = arith.constant 0 : index
    %c0_85 = arith.constant 0 : index
    %212 = vector.load %arg18[%c0_83, %c0_84, %c0_85] : memref<1x8x32xf32, #tpu.memory_space<vmem>>, vector<1x8x32xf32>
    %213 = vector.shape_cast %212 : vector<1x8x32xf32> to vector<8x32xf32>
    %214 = vector.shape_cast %211 : vector<8x32xf32> to vector<1x8x32xf32>
    tpu.vector_store %arg18[%c0_83, %c0_84, %c0_85], %214 {strides = array<i32>} : memref<1x8x32xf32, #tpu.memory_space<vmem>>, vector<1x8x32xf32>,
    return
  }
  func.func @transform_0(%arg0: i32, %arg1: i32) -> (i32, i32, i32) {
    %c0_i32 = arith.constant 0 : i32
    %c0_i32_0 = arith.constant 0 : i32
    %c0_i32_1 = arith.constant 0 : i32
    return %arg0, %c0_i32, %c0_i32_0 : i32, i32, i32
  }
  func.func @transform_1(%arg0: i32, %arg1: i32) -> (i32, i32, i32) {
    %c0_i32 = arith.constant 0 : i32
    %c0_i32_0 = arith.constant 0 : i32
    %c0_i32_1 = arith.constant 0 : i32
    return %arg0, %c0_i32, %c0_i32_0 : i32, i32, i32
  }
  func.func @transform_2(%arg0: i32, %arg1: i32) -> (i32, i32) {
    %c0_i32 = arith.constant 0 : i32
    %c0_i32_0 = arith.constant 0 : i32
    %c0_i32_1 = arith.constant 0 : i32
    return %c0_i32, %c0_i32_0 : i32, i32
  }
  func.func @transform_3(%arg0: i32, %arg1: i32) -> (i32, i32) {
    %c0_i32 = arith.constant 0 : i32
    %c0_i32_0 = arith.constant 0 : i32
    %c0_i32_1 = arith.constant 0 : i32
    return %c0_i32, %c0_i32_0 : i32, i32
  }
  func.func @transform_4(%arg0: i32, %arg1: i32) -> (i32, i32, i32) {
    %c0_i32 = arith.constant 0 : i32
    %c0_i32_0 = arith.constant 0 : i32
    %c0_i32_1 = arith.constant 0 : i32
    return %arg1, %c0_i32, %c0_i32_0 : i32, i32, i32
  }
  func.func @transform_5(%arg0: i32, %arg1: i32) -> (i32, i32, i32) {
    %c0_i32 = arith.constant 0 : i32
    %c0_i32_0 = arith.constant 0 : i32
    %c0_i32_1 = arith.constant 0 : i32
    return %arg1, %c0_i32, %c0_i32_0 : i32, i32, i32
  }
  func.func @transform_6(%arg0: i32, %arg1: i32) -> (i32, i32, i32) {
    %c0_i32 = arith.constant 0 : i32
    %c0_i32_0 = arith.constant 0 : i32
    %c0_i32_1 = arith.constant 0 : i32
    return %arg1, %c0_i32, %c0_i32_0 : i32, i32, i32
  }
  func.func @transform_7(%arg0: i32, %arg1: i32) -> (i32, i32, i32) {
    %c0_i32 = arith.constant 0 : i32
    %c0_i32_0 = arith.constant 0 : i32
    %c0_i32_1 = arith.constant 0 : i32
    return %arg1, %c0_i32, %c0_i32_0 : i32, i32, i32
  }
  func.func @transform_8(%arg0: i32, %arg1: i32) -> (i32, i32, i32) {
    %c0_i32 = arith.constant 0 : i32
    %c0_i32_0 = arith.constant 0 : i32
    %c0_i32_1 = arith.constant 0 : i32
    return %arg1, %c0_i32, %c0_i32_0 : i32, i32, i32
  }
  func.func @transform_9(%arg0: i32, %arg1: i32) -> (i32, i32, i32) {
    %c0_i32 = arith.constant 0 : i32
    %c0_i32_0 = arith.constant 0 : i32
    %c0_i32_1 = arith.constant 0 : i32
    return %arg1, %c0_i32, %c0_i32_0 : i32, i32, i32
  }
  func.func @transform_10(%arg0: i32, %arg1: i32) -> (i32, i32, i32) {
    %c0_i32 = arith.constant 0 : i32
    %c0_i32_0 = arith.constant 0 : i32
    %c0_i32_1 = arith.constant 0 : i32
    return %arg1, %c0_i32, %c0_i32_0 : i32, i32, i32
  }
  func.func @transform_11(%arg0: i32, %arg1: i32) -> (i32, i32, i32) {
    %c0_i32 = arith.constant 0 : i32
    %c0_i32_0 = arith.constant 0 : i32
    %c0_i32_1 = arith.constant 0 : i32
    return %arg1, %c0_i32, %c0_i32_0 : i32, i32, i32
  }
  func.func @transform_12(%arg0: i32, %arg1: i32) -> (i32, i32, i32) {
    %c0_i32 = arith.constant 0 : i32
    %c0_i32_0 = arith.constant 0 : i32
    %c0_i32_1 = arith.constant 0 : i32
    return %arg1, %c0_i32, %c0_i32_0 : i32, i32, i32
  }
  func.func @transform_13(%arg0: i32, %arg1: i32) -> (i32, i32, i32) {
    %c0_i32 = arith.constant 0 : i32
    %c0_i32_0 = arith.constant 0 : i32
    %c0_i32_1 = arith.constant 0 : i32
    return %arg1, %c0_i32, %c0_i32_0 : i32, i32, i32
  }
  func.func @transform_14(%arg0: i32, %arg1: i32) -> (i32, i32, i32) {
    %c0_i32 = arith.constant 0 : i32
    %c0_i32_0 = arith.constant 0 : i32
    %c0_i32_1 = arith.constant 0 : i32
    return %arg1, %c0_i32, %c0_i32_0 : i32, i32, i32
  }
  func.func @transform_15(%arg0: i32, %arg1: i32) -> (i32, i32, i32) {
    %c0_i32 = arith.constant 0 : i32
    %c0_i32_0 = arith.constant 0 : i32
    %c0_i32_1 = arith.constant 0 : i32
    return %arg1, %c0_i32, %c0_i32_0 : i32, i32, i32
  }
  func.func @transform_16(%arg0: i32, %arg1: i32) -> (i32, i32, i32) {
    %c0_i32 = arith.constant 0 : i32
    %c0_i32_0 = arith.constant 0 : i32
    %c0_i32_1 = arith.constant 0 : i32
    return %arg0, %c0_i32, %c0_i32_0 : i32, i32, i32
  }
}

</mosaic_0001>

<llo_original>
// kernel: simcse_forward.3
$region0: #{simcse_forward.3}
  #allocation0 [shape = 'u32[]', space=smem, size = 0x4, offset = 0x4, fixed_abs, tag = 'smem constant byte address 0x4 - core index']
  #allocation1 [shape = 'u32[144,128]{1,0:T(1,128)}', space=vmem, size = 0x12000, scoped, tag = 'internal scratch']
  %s0 = inlined_call_operand.vmem [shape: f32[2,32], index: 0, kind: input, shape index: {}]
  %s1 = inlined_call_operand.vmem [shape: bf16[32,32], index: 1, kind: input, shape index: {}]
  %s2 = inlined_call_operand.vmem [shape: f32[1,32], index: 2, kind: input, shape index: {}]
  %s3 = inlined_call_operand.hbm [shape: f32[2,32], index: 3, kind: output, shape index: {}]
  %s4 = sld [smem:[#allocation0]]
  $region22: #{simcse_forward.3} parent=0
    _
  %s6 = ssub.s32 1, %s4
  %s7 = scalar_select 0, %s6, %s4
  $region1: #{simcse_forward.3} parent=0
    #allocation2 [shape = 'u8[1024]{0}', space=vmem, size = 0x400, scoped, tag = 'output window, operand 0, single buffered']
    #allocation3 [shape = 's32[1]{0}', space=sflag, size = 0x4, scoped, tag = 'scoped memory for simcse_forward.3']
    %8 = vsyncpa [#allocation3], 0
    // Predicated region
    $region2: #{simcse_forward.3} parent=1 // pred_check
      _
    $region3: #{simcse_forward.3} parent=1 // pred_check_branch
      %10 = sbr.rel (0) target = $region5
    $region4: #{simcse_forward.3} parent=1 // pred_region
      _
    $region5: #{simcse_forward.3} parent=1 // pred_fallthru
      _
    // Predicated region
    $region6: #{simcse_forward.3} parent=1 // pred_check
      _
    $region7: #{simcse_forward.3} parent=1 // pred_check_branch
      %12 = sbr.rel (0) target = $region9
    $region8: #{simcse_forward.3} parent=1 // pred_region
      _
    $region9: #{simcse_forward.3} parent=1 // pred_fallthru
      _
    // Predicated region
    $region10: #{simcse_forward.3} parent=1 // pred_check
      _
    $region11: #{simcse_forward.3} parent=1 // pred_check_branch
      %14 = sbr.rel (0) target = $region13
    $region12: #{simcse_forward.3} parent=1 // pred_region
      _
    $region13: #{simcse_forward.3} parent=1 // pred_fallthru
      _
    %v16 = vld [vmem:[%s0] sm:$0x3]
    %v17 = vpack.c.bf16 %v16, %v16
    %v18 = vld [vmem:[%s1] sm:$0xf]
    %v19 = vld [vmem:[%s1 + $0x4] sm:$0xf]
    %v20 = vld [vmem:[%s1 + $0x8] sm:$0xf]
    %v21 = vld [vmem:[%s1 + $0xc] sm:$0xf]
    %v22 = vld [vmem:[%s2] sm:$0x1]
    %v24 = vlaneseq
    %v25 = vshrl.u32 %v24, 7
    %v26 = vsub.s32 0, %v25
    %v27 = vrot.slane %v22, %v26
    %v33 = vunpack.c.l.b16 %v18
    %v34 = vunpack.c.l.b16 %v19
    %v35 = vunpack.c.l.b16 %v20
    %v36 = vunpack.c.l.b16 %v21
    %v37 = vpack.c.b16 %v34, %v33
    %v38 = vpack.c.b16 %v36, %v35
    %vm41 = vcmask 261120
    %v43 = vsel %vm41, %v17, 0
    %45 = vmatprep.subr.bf16.mxu0 0
    %46 = vmatpush1.bf16.msra.mxu0 0
    %47 = vmatprep.subr.bf16.mxu0 0
    %48 = vmatpush1.bf16.msra.mxu0 0
    %49 = vmatprep.subr.bf16.mxu0 0
    %50 = vmatpush1.bf16.msra.mxu0 0
    %51 = vmatprep.subr.bf16.mxu0 0
    %52 = vmatpush1.bf16.msra.mxu0 0
    %53 = vmatprep.subr.bf16.mxu0 0
    %54 = vmatpush1.bf16.msra.mxu0 0
    %55 = vmatprep.subr.bf16.mxu0 0
    %56 = vmatpush1.bf16.msra.mxu0 0
    %57 = vmatprep.subr.bf16.mxu0 0
    %58 = vmatpush1.bf16.msra.mxu0 %v38
    %59 = vmatprep.subr.bf16.mxu0 0
    %60 = vmatpush1.bf16.msra.mxu0 %v37
    %61 = vmatprep.subr.bf16.mxu0 0
    %62 = vmatpush2.bf16.msra.mxu0 0
    %63 = vmatprep.subr.bf16.mxu0 0
    %64 = vmatpush2.bf16.msra.mxu0 0
    %65 = vmatprep.subr.bf16.mxu0 0
    %66 = vmatpush2.bf16.msra.mxu0 0
    %67 = vmatprep.subr.bf16.mxu0 0
    %68 = vmatpush2.bf16.msra.mxu0 0
    %69 = vmatprep.subr.bf16.mxu0 0
    %70 = vmatpush2.bf16.msra.mxu0 0
    %71 = vmatprep.subr.bf16.mxu0 0
    %72 = vmatpush2.bf16.msra.mxu0 0
    %73 = vmatprep.subr.bf16.mxu0 0
    %74 = vmatpush2.bf16.msra.mxu0 0
    %75 = vmatprep.subr.bf16.mxu0 0
    %76 = vmatpush2.bf16.msra.mxu0 0
    %77 = vmatprep.mubr.bf16.mxu0 0
    %78 = vmatmul.mubr.bf16.gmra.mxu0 %v43
    %v79 = vpop.f32.mrf.mxu0
    %v80 = vadd.f32 %v27, %v79
    %v81 = vpop.f32.mrf.mxu0
    %v82 = vpop.f32.mrf.mxu0
    %v83 = vpop.f32.mrf.mxu0
    %84 = vdwg.mxu0
    %v85 = vtanh.pop %v80
    %vm86 = vcmask 254976
    %87 = vst.msk [vmem:[#allocation2] sm:$0x3] %vm86, %v85
    // Predicated region
    $region14: #{simcse_forward.3} parent=1 // pred_check
      _
    $region15: #{simcse_forward.3} parent=1 // pred_check_branch
      %89 = sbr.rel (0) target = $region17
    $region16: #{simcse_forward.3} parent=1 // pred_region
      %s91 = ssub.s32 32, 32
      %92 = vsyncadd [#allocation3], %s91
      %s94 = sshll.u32 [#allocation2], 4
      %s95 = int_to_ptr.vmem [resolvable:$true] %s94
      %97 = dma.vmem_to_hbm [thread:$0]  %s95, 32, %s3, [#allocation3]
    $region17: #{simcse_forward.3} parent=1 // pred_fallthru
      _
    // Predicated region
    $region18: #{simcse_forward.3} parent=1 // pred_check
      _
    $region19: #{simcse_forward.3} parent=1 // pred_check_branch
      %99 = sbr.rel (0) target = $region21
    $region20: #{simcse_forward.3} parent=1 // pred_region
      %100 = dma.done [#allocation3], 32
    $region21: #{simcse_forward.3} parent=1 // pred_fallthru
      _
    %101 = vsyncpa [#allocation3], 1

// kernel: simcse_forward.2
$region0: #{simcse_forward.2}
  #allocation0 [shape = 'u32[]', space=smem, size = 0x4, offset = 0x4, fixed_abs, tag = 'smem constant byte address 0x4 - core index']
  #allocation1 [shape = 'u32[144,128]{1,0:T(1,128)}', space=vmem, size = 0x12000, scoped, tag = 'internal scratch']
  %s0 = inlined_call_operand.vmem [shape: f32[2,8,32], index: 0, kind: input, shape index: {}]
  %s1 = inlined_call_operand.vmem [shape: f32[2,1,8], index: 1, kind: input, shape index: {}]
  %s2 = inlined_call_operand.vmem [shape: f32[1,32], index: 2, kind: input, shape index: {}]
  %s3 = inlined_call_operand.vmem [shape: f32[1,32], index: 3, kind: input, shape index: {}]
  %s4 = inlined_call_operand.vmem [shape: bf16[2,32,96], index: 4, kind: input, shape index: {}]
  %s5 = inlined_call_operand.vmem [shape: f32[2,1,96], index: 5, kind: input, shape index: {}]
  %s6 = inlined_call_operand.vmem [shape: bf16[2,32,32], index: 6, kind: input, shape index: {}]
  %s7 = inlined_call_operand.vmem [shape: f32[2,1,32], index: 7, kind: input, shape index: {}]
  %s8 = inlined_call_operand.vmem [shape: f32[2,1,32], index: 8, kind: input, shape index: {}]
  %s9 = inlined_call_operand.vmem [shape: f32[2,1,32], index: 9, kind: input, shape index: {}]
  %s10 = inlined_call_operand.vmem [shape: bf16[2,32,64], index: 10, kind: input, shape index: {}]
  %s11 = inlined_call_operand.vmem [shape: f32[2,1,64], index: 11, kind: input, shape index: {}]
  %s12 = inlined_call_operand.vmem [shape: bf16[2,64,32], index: 12, kind: input, shape index: {}]
  %s13 = inlined_call_operand.vmem [shape: f32[2,1,32], index: 13, kind: input, shape index: {}]
  %s14 = inlined_call_operand.vmem [shape: f32[2,1,32], index: 14, kind: input, shape index: {}]
  %s15 = inlined_call_operand.vmem [shape: f32[2,1,32], index: 15, kind: input, shape index: {}]
  %s16 = inlined_call_operand.vmem [shape: f32[2,8,32], index: 16, kind: output, shape index: {}]
  %s17 = sld [smem:[#allocation0]]
  $region101: #{simcse_forward.2} parent=0
    _
  %s19 = ssub.s32 1, %s17
  %s20 = scalar_select 0, %s19, %s17
  loop: start=0, step=1, limit=6
  $region2: #{simcse_forward.2} parent=0 // loop_pre_header
    _
  $region3: #{simcse_forward.2} parent=0 // loop_header
    %s22 = sphi 0, %s26
    %p23 = scmp.ge.s32.totalorder %s22, 6
    %s29 = sphi 0, %s41
    %s30 = sphi 0, %s37
    %s31 = sphi 0, %s29
    %s32 = sphi 0, %s30
    %s33 = sphi 0, %s31
    %s34 = sphi 0, %s32
    %s44 = sphi 0, %s46
    %s47 = sphi 0, %s44
    %s48 = sphi 0, %s47
    %s64 = sphi 0, %s48
    %s70 = sphi 0, %s72
    %s73 = sphi 0, %s70
    %s74 = sphi 0, %s73
    %s90 = sphi 0, %s74
    %s94 = sphi 0, %s94
    %s96 = sphi 0, %s94
    %s97 = sphi 0, %s96
    %s111 = sphi 0, %s97
    %s115 = sphi 0, %s115
    %s117 = sphi 0, %s115
    %s118 = sphi 0, %s117
    %s132 = sphi 0, %s118
    %s138 = sphi 0, %s140
    %s141 = sphi 0, %s138
    %s142 = sphi 0, %s141
    %s158 = sphi 0, %s142
    %s164 = sphi 0, %s166
    %s167 = sphi 0, %s164
    %s168 = sphi 0, %s167
    %s184 = sphi 0, %s168
    %s190 = sphi 0, %s192
    %s193 = sphi 0, %s190
    %s194 = sphi 0, %s193
    %s210 = sphi 0, %s194
    %s216 = sphi 0, %s218
    %s219 = sphi 0, %s216
    %s220 = sphi 0, %s219
    %s236 = sphi 0, %s220
    %s242 = sphi 0, %s244
    %s245 = sphi 0, %s242
    %s246 = sphi 0, %s245
    %s262 = sphi 0, %s246
    %s268 = sphi 0, %s270
    %s271 = sphi 0, %s268
    %s272 = sphi 0, %s271
    %s288 = sphi 0, %s272
    %s294 = sphi 0, %s296
    %s297 = sphi 0, %s294
    %s298 = sphi 0, %s297
    %s314 = sphi 0, %s298
    %s320 = sphi 0, %s322
    %s323 = sphi 0, %s320
    %s324 = sphi 0, %s323
    %s340 = sphi 0, %s324
    %s346 = sphi 0, %s348
    %s349 = sphi 0, %s346
    %s350 = sphi 0, %s349
    %s366 = sphi 0, %s350
    %s372 = sphi 0, %s374
    %s375 = sphi 0, %s372
    %s376 = sphi 0, %s375
    %s392 = sphi 0, %s376
    %s398 = sphi 0, %s400
    %s401 = sphi 0, %s398
    %s402 = sphi 0, %s401
    %s418 = sphi 0, %s402
    %s424 = sphi 0, %s426
    %s427 = sphi 0, %s424
    %s428 = sphi 0, %s427
    %s444 = sphi 0, %s428
    %s450 = sphi 0, %s452
    %s453 = sphi 0, %s450
    %s454 = sphi 0, %s453
    %s470 = sphi 0, %s454
  $region4: #{simcse_forward.2} parent=0 // loop_header_branch
    %25 = sbr.rel (%p23) target = $region8
  $region5: #{simcse_forward.2} parent=0 // loop_body
    %s27 = ssub.s32 %s22, 1
    %s28 = ssub.s32 %s22, 2
    %s35 = sadd.s32 1, %s30
    %p36 = scmp.ge.s32.totalorder %s35, 2
    %s37 = scalar_select %p36, 0, %s35
    %s38 = sadd.s32 1, %s29
    %s39 = scalar_select %p36, %s38, %s29
    %p40 = scmp.ge.s32.totalorder %s39, 2
    %s41 = scalar_select %p40, 0, %s39
    %s42 = ssub.s32 %s29, %s41
    %p43 = scmp.eq.s32.totalorder %s42, 0
    %s45 = sadd.s32 %s44, 1
    %s46 = scalar_select %p43, %s44, %s45
    %p49 = pneg %p43
    %p50 = scmp.eq.s32.totalorder %s22, 3
    %p51 = por %p49, %p50
    %p52 = scmp.ne.s32.totalorder %s44, %s47
    %p53 = scmp.eq.s32.totalorder %s22, 0
    %p54 = por %p52, %p53
    %p55 = scmp.ne.s32.totalorder %s44, %s47
    %p56 = scmp.eq.s32.totalorder %s27, 3
    %p57 = por %p55, %p56
    %p58 = scmp.ne.s32.totalorder %s47, %s48
    %p59 = scmp.eq.s32.totalorder %s27, 0
    %p60 = por %p58, %p59
    %p61 = scmp.ne.s32.totalorder %s47, %s48
    %p62 = scmp.eq.s32.totalorder %s28, 3
    %p63 = por %p61, %p62
    %p65 = scmp.ne.s32.totalorder %s48, %s64
    %p66 = scmp.eq.s32.totalorder %s28, 0
    %p67 = por %p65, %p66
    %s68 = ssub.s32 %s29, %s41
    %p69 = scmp.eq.s32.totalorder %s68, 0
    %s71 = sadd.s32 %s70, 1
    %s72 = scalar_select %p69, %s70, %s71
    %p75 = pneg %p69
    %p76 = scmp.eq.s32.totalorder %s22, 3
    %p77 = por %p75, %p76
    %p78 = scmp.ne.s32.totalorder %s70, %s73
    %p79 = scmp.eq.s32.totalorder %s22, 0
    %p80 = por %p78, %p79
    %p81 = scmp.ne.s32.totalorder %s70, %s73
    %p82 = scmp.eq.s32.totalorder %s27, 3
    %p83 = por %p81, %p82
    %p84 = scmp.ne.s32.totalorder %s73, %s74
    %p85 = scmp.eq.s32.totalorder %s27, 0
    %p86 = por %p84, %p85
    %p87 = scmp.ne.s32.totalorder %s73, %s74
    %p88 = scmp.eq.s32.totalorder %s28, 3
    %p89 = por %p87, %p88
    %p91 = scmp.ne.s32.totalorder %s74, %s90
    %p92 = scmp.eq.s32.totalorder %s28, 0
    %p93 = por %p91, %p92
    %s95 = sadd.s32 %s94, 1
    %p98 = scmp.eq.s32.totalorder %s22, 3
    %p99 = scmp.ne.s32.totalorder %s94, %s96
    %p100 = scmp.eq.s32.totalorder %s22, 0
    %p101 = por %p99, %p100
    %p102 = scmp.ne.s32.totalorder %s94, %s96
    %p103 = scmp.eq.s32.totalorder %s27, 3
    %p104 = por %p102, %p103
    %p105 = scmp.ne.s32.totalorder %s96, %s97
    %p106 = scmp.eq.s32.totalorder %s27, 0
    %p107 = por %p105, %p106
    %p108 = scmp.ne.s32.totalorder %s96, %s97
    %p109 = scmp.eq.s32.totalorder %s28, 3
    %p110 = por %p108, %p109
    %p112 = scmp.ne.s32.totalorder %s97, %s111
    %p113 = scmp.eq.s32.totalorder %s28, 0
    %p114 = por %p112, %p113
    %s116 = sadd.s32 %s115, 1
    %p119 = scmp.eq.s32.totalorder %s22, 3
    %p120 = scmp.ne.s32.totalorder %s115, %s117
    %p121 = scmp.eq.s32.totalorder %s22, 0
    %p122 = por %p120, %p121
    %p123 = scmp.ne.s32.totalorder %s115, %s117
    %p124 = scmp.eq.s32.totalorder %s27, 3
    %p125 = por %p123, %p124
    %p126 = scmp.ne.s32.totalorder %s117, %s118
    %p127 = scmp.eq.s32.totalorder %s27, 0
    %p128 = por %p126, %p127
    %p129 = scmp.ne.s32.totalorder %s117, %s118
    %p130 = scmp.eq.s32.totalorder %s28, 3
    %p131 = por %p129, %p130
    %p133 = scmp.ne.s32.totalorder %s118, %s132
    %p134 = scmp.eq.s32.totalorder %s28, 0
    %p135 = por %p133, %p134
    %s136 = ssub.s32 %s30, %s37
    %p137 = scmp.eq.s32.totalorder %s136, 0
    %s139 = sadd.s32 %s138, 1
    %s140 = scalar_select %p137, %s138, %s139
    %p143 = pneg %p137
    %p144 = scmp.eq.s32.totalorder %s22, 3
    %p145 = por %p143, %p144
    %p146 = scmp.ne.s32.totalorder %s138, %s141
    %p147 = scmp.eq.s32.totalorder %s22, 0
    %p148 = por %p146, %p147
    %p149 = scmp.ne.s32.totalorder %s138, %s141
    %p150 = scmp.eq.s32.totalorder %s27, 3
    %p151 = por %p149, %p150
    %p152 = scmp.ne.s32.totalorder %s141, %s142
    %p153 = scmp.eq.s32.totalorder %s27, 0
    %p154 = por %p152, %p153
    %p155 = scmp.ne.s32.totalorder %s141, %s142
    %p156 = scmp.eq.s32.totalorder %s28, 3
    %p157 = por %p155, %p156
    %p159 = scmp.ne.s32.totalorder %s142, %s158
    %p160 = scmp.eq.s32.totalorder %s28, 0
    %p161 = por %p159, %p160
    %s162 = ssub.s32 %s30, %s37
    %p163 = scmp.eq.s32.totalorder %s162, 0
    %s165 = sadd.s32 %s164, 1
    %s166 = scalar_select %p163, %s164, %s165
    %p169 = pneg %p163
    %p170 = scmp.eq.s32.totalorder %s22, 3
    %p171 = por %p169, %p170
    %p172 = scmp.ne.s32.totalorder %s164, %s167
    %p173 = scmp.eq.s32.totalorder %s22, 0
    %p174 = por %p172, %p173
    %p175 = scmp.ne.s32.totalorder %s164, %s167
    %p176 = scmp.eq.s32.totalorder %s27, 3
    %p177 = por %p175, %p176
    %p178 = scmp.ne.s32.totalorder %s167, %s168
    %p179 = scmp.eq.s32.totalorder %s27, 0
    %p180 = por %p178, %p179
    %p181 = scmp.ne.s32.totalorder %s167, %s168
    %p182 = scmp.eq.s32.totalorder %s28, 3
    %p183 = por %p181, %p182
    %p185 = scmp.ne.s32.totalorder %s168, %s184
    %p186 = scmp.eq.s32.totalorder %s28, 0
    %p187 = por %p185, %p186
    %s188 = ssub.s32 %s30, %s37
    %p189 = scmp.eq.s32.totalorder %s188, 0
    %s191 = sadd.s32 %s190, 1
    %s192 = scalar_select %p189, %s190, %s191
    %p195 = pneg %p189
    %p196 = scmp.eq.s32.totalorder %s22, 3
    %p197 = por %p195, %p196
    %p198 = scmp.ne.s32.totalorder %s190, %s193
    %p199 = scmp.eq.s32.totalorder %s22, 0
    %p200 = por %p198, %p199
    %p201 = scmp.ne.s32.totalorder %s190, %s193
    %p202 = scmp.eq.s32.totalorder %s27, 3
    %p203 = por %p201, %p202
    %p204 = scmp.ne.s32.totalorder %s193, %s194
    %p205 = scmp.eq.s32.totalorder %s27, 0
    %p206 = por %p204, %p205
    %p207 = scmp.ne.s32.totalorder %s193, %s194
    %p208 = scmp.eq.s32.totalorder %s28, 3
    %p209 = por %p207, %p208
    %p211 = scmp.ne.s32.totalorder %s194, %s210
    %p212 = scmp.eq.s32.totalorder %s28, 0
    %p213 = por %p211, %p212
    %s214 = ssub.s32 %s30, %s37
    %p215 = scmp.eq.s32.totalorder %s214, 0
    %s217 = sadd.s32 %s216, 1
    %s218 = scalar_select %p215, %s216, %s217
    %p221 = pneg %p215
    %p222 = scmp.eq.s32.totalorder %s22, 3
    %p223 = por %p221, %p222
    %p224 = scmp.ne.s32.totalorder %s216, %s219
    %p225 = scmp.eq.s32.totalorder %s22, 0
    %p226 = por %p224, %p225
    %p227 = scmp.ne.s32.totalorder %s216, %s219
    %p228 = scmp.eq.s32.totalorder %s27, 3
    %p229 = por %p227, %p228
    %p230 = scmp.ne.s32.totalorder %s219, %s220
    %p231 = scmp.eq.s32.totalorder %s27, 0
    %p232 = por %p230, %p231
    %p233 = scmp.ne.s32.totalorder %s219, %s220
    %p234 = scmp.eq.s32.totalorder %s28, 3
    %p235 = por %p233, %p234
    %p237 = scmp.ne.s32.totalorder %s220, %s236
    %p238 = scmp.eq.s32.totalorder %s28, 0
    %p239 = por %p237, %p238
    %s240 = ssub.s32 %s30, %s37
    %p241 = scmp.eq.s32.totalorder %s240, 0
    %s243 = sadd.s32 %s242, 1
    %s244 = scalar_select %p241, %s242, %s243
    %p247 = pneg %p241
    %p248 = scmp.eq.s32.totalorder %s22, 3
    %p249 = por %p247, %p248
    %p250 = scmp.ne.s32.totalorder %s242, %s245
    %p251 = scmp.eq.s32.totalorder %s22, 0
    %p252 = por %p250, %p251
    %p253 = scmp.ne.s32.totalorder %s242, %s245
    %p254 = scmp.eq.s32.totalorder %s27, 3
    %p255 = por %p253, %p254
    %p256 = scmp.ne.s32.totalorder %s245, %s246
    %p257 = scmp.eq.s32.totalorder %s27, 0
    %p258 = por %p256, %p257
    %p259 = scmp.ne.s32.totalorder %s245, %s246
    %p260 = scmp.eq.s32.totalorder %s28, 3
    %p261 = por %p259, %p260
    %p263 = scmp.ne.s32.totalorder %s246, %s262
    %p264 = scmp.eq.s32.totalorder %s28, 0
    %p265 = por %p263, %p264
    %s266 = ssub.s32 %s30, %s37
    %p267 = scmp.eq.s32.totalorder %s266, 0
    %s269 = sadd.s32 %s268, 1
    %s270 = scalar_select %p267, %s268, %s269
    %p273 = pneg %p267
    %p274 = scmp.eq.s32.totalorder %s22, 3
    %p275 = por %p273, %p274
    %p276 = scmp.ne.s32.totalorder %s268, %s271
    %p277 = scmp.eq.s32.totalorder %s22, 0
    %p278 = por %p276, %p277
    %p279 = scmp.ne.s32.totalorder %s268, %s271
    %p280 = scmp.eq.s32.totalorder %s27, 3
    %p281 = por %p279, %p280
    %p282 = scmp.ne.s32.totalorder %s271, %s272
    %p283 = scmp.eq.s32.totalorder %s27, 0
    %p284 = por %p282, %p283
    %p285 = scmp.ne.s32.totalorder %s271, %s272
    %p286 = scmp.eq.s32.totalorder %s28, 3
    %p287 = por %p285, %p286
    %p289 = scmp.ne.s32.totalorder %s272, %s288
    %p290 = scmp.eq.s32.totalorder %s28, 0
    %p291 = por %p289, %p290
    %s292 = ssub.s32 %s30, %s37
    %p293 = scmp.eq.s32.totalorder %s292, 0
    %s295 = sadd.s32 %s294, 1
    %s296 = scalar_select %p293, %s294, %s295
    %p299 = pneg %p293
    %p300 = scmp.eq.s32.totalorder %s22, 3
    %p301 = por %p299, %p300
    %p302 = scmp.ne.s32.totalorder %s294, %s297
    %p303 = scmp.eq.s32.totalorder %s22, 0
    %p304 = por %p302, %p303
    %p305 = scmp.ne.s32.totalorder %s294, %s297
    %p306 = scmp.eq.s32.totalorder %s27, 3
    %p307 = por %p305, %p306
    %p308 = scmp.ne.s32.totalorder %s297, %s298
    %p309 = scmp.eq.s32.totalorder %s27, 0
    %p310 = por %p308, %p309
    %p311 = scmp.ne.s32.totalorder %s297, %s298
    %p312 = scmp.eq.s32.totalorder %s28, 3
    %p313 = por %p311, %p312
    %p315 = scmp.ne.s32.totalorder %s298, %s314
    %p316 = scmp.eq.s32.totalorder %s28, 0
    %p317 = por %p315, %p316
    %s318 = ssub.s32 %s30, %s37
    %p319 = scmp.eq.s32.totalorder %s318, 0
    %s321 = sadd.s32 %s320, 1
    %s322 = scalar_select %p319, %s320, %s321
    %p325 = pneg %p319
    %p326 = scmp.eq.s32.totalorder %s22, 3
    %p327 = por %p325, %p326
    %p328 = scmp.ne.s32.totalorder %s320, %s323
    %p329 = scmp.eq.s32.totalorder %s22, 0
    %p330 = por %p328, %p329
    %p331 = scmp.ne.s32.totalorder %s320, %s323
    %p332 = scmp.eq.s32.totalorder %s27, 3
    %p333 = por %p331, %p332
    %p334 = scmp.ne.s32.totalorder %s323, %s324
    %p335 = scmp.eq.s32.totalorder %s27, 0
    %p336 = por %p334, %p335
    %p337 = scmp.ne.s32.totalorder %s323, %s324
    %p338 = scmp.eq.s32.totalorder %s28, 3
    %p339 = por %p337, %p338
    %p341 = scmp.ne.s32.totalorder %s324, %s340
    %p342 = scmp.eq.s32.totalorder %s28, 0
    %p343 = por %p341, %p342
    %s344 = ssub.s32 %s30, %s37
    %p345 = scmp.eq.s32.totalorder %s344, 0
    %s347 = sadd.s32 %s346, 1
    %s348 = scalar_select %p345, %s346, %s347
    %p351 = pneg %p345
    %p352 = scmp.eq.s32.totalorder %s22, 3
    %p353 = por %p351, %p352
    %p354 = scmp.ne.s32.totalorder %s346, %s349
    %p355 = scmp.eq.s32.totalorder %s22, 0
    %p356 = por %p354, %p355
    %p357 = scmp.ne.s32.totalorder %s346, %s349
    %p358 = scmp.eq.s32.totalorder %s27, 3
    %p359 = por %p357, %p358
    %p360 = scmp.ne.s32.totalorder %s349, %s350
    %p361 = scmp.eq.s32.totalorder %s27, 0
    %p362 = por %p360, %p361
    %p363 = scmp.ne.s32.totalorder %s349, %s350
    %p364 = scmp.eq.s32.totalorder %s28, 3
    %p365 = por %p363, %p364
    %p367 = scmp.ne.s32.totalorder %s350, %s366
    %p368 = scmp.eq.s32.totalorder %s28, 0
    %p369 = por %p367, %p368
    %s370 = ssub.s32 %s30, %s37
    %p371 = scmp.eq.s32.totalorder %s370, 0
    %s373 = sadd.s32 %s372, 1
    %s374 = scalar_select %p371, %s372, %s373
    %p377 = pneg %p371
    %p378 = scmp.eq.s32.totalorder %s22, 3
    %p379 = por %p377, %p378
    %p380 = scmp.ne.s32.totalorder %s372, %s375
    %p381 = scmp.eq.s32.totalorder %s22, 0
    %p382 = por %p380, %p381
    %p383 = scmp.ne.s32.totalorder %s372, %s375
    %p384 = scmp.eq.s32.totalorder %s27, 3
    %p385 = por %p383, %p384
    %p386 = scmp.ne.s32.totalorder %s375, %s376
    %p387 = scmp.eq.s32.totalorder %s27, 0
    %p388 = por %p386, %p387
    %p389 = scmp.ne.s32.totalorder %s375, %s376
    %p390 = scmp.eq.s32.totalorder %s28, 3
    %p391 = por %p389, %p390
    %p393 = scmp.ne.s32.totalorder %s376, %s392
    %p394 = scmp.eq.s32.totalorder %s28, 0
    %p395 = por %p393, %p394
    %s396 = ssub.s32 %s30, %s37
    %p397 = scmp.eq.s32.totalorder %s396, 0
    %s399 = sadd.s32 %s398, 1
    %s400 = scalar_select %p397, %s398, %s399
    %p403 = pneg %p397
    %p404 = scmp.eq.s32.totalorder %s22, 3
    %p405 = por %p403, %p404
    %p406 = scmp.ne.s32.totalorder %s398, %s401
    %p407 = scmp.eq.s32.totalorder %s22, 0
    %p408 = por %p406, %p407
    %p409 = scmp.ne.s32.totalorder %s398, %s401
    %p410 = scmp.eq.s32.totalorder %s27, 3
    %p411 = por %p409, %p410
    %p412 = scmp.ne.s32.totalorder %s401, %s402
    %p413 = scmp.eq.s32.totalorder %s27, 0
    %p414 = por %p412, %p413
    %p415 = scmp.ne.s32.totalorder %s401, %s402
    %p416 = scmp.eq.s32.totalorder %s28, 3
    %p417 = por %p415, %p416
    %p419 = scmp.ne.s32.totalorder %s402, %s418
    %p420 = scmp.eq.s32.totalorder %s28, 0
    %p421 = por %p419, %p420
    %s422 = ssub.s32 %s30, %s37
    %p423 = scmp.eq.s32.totalorder %s422, 0
    %s425 = sadd.s32 %s424, 1
    %s426 = scalar_select %p423, %s424, %s425
    %p429 = pneg %p423
    %p430 = scmp.eq.s32.totalorder %s22, 3
    %p431 = por %p429, %p430
    %p432 = scmp.ne.s32.totalorder %s424, %s427
    %p433 = scmp.eq.s32.totalorder %s22, 0
    %p434 = por %p432, %p433
    %p435 = scmp.ne.s32.totalorder %s424, %s427
    %p436 = scmp.eq.s32.totalorder %s27, 3
    %p437 = por %p435, %p436
    %p438 = scmp.ne.s32.totalorder %s427, %s428
    %p439 = scmp.eq.s32.totalorder %s27, 0
    %p440 = por %p438, %p439
    %p441 = scmp.ne.s32.totalorder %s427, %s428
    %p442 = scmp.eq.s32.totalorder %s28, 3
    %p443 = por %p441, %p442
    %p445 = scmp.ne.s32.totalorder %s428, %s444
    %p446 = scmp.eq.s32.totalorder %s28, 0
    %p447 = por %p445, %p446
    %s448 = ssub.s32 %s29, %s41
    %p449 = scmp.eq.s32.totalorder %s448, 0
    %s451 = sadd.s32 %s450, 1
    %s452 = scalar_select %p449, %s450, %s451
    %p455 = pneg %p449
    %p456 = scmp.eq.s32.totalorder %s22, 3
    %p457 = por %p455, %p456
    %p458 = scmp.ne.s32.totalorder %s450, %s453
    %p459 = scmp.eq.s32.totalorder %s22, 0
    %p460 = por %p458, %p459
    %p461 = scmp.ne.s32.totalorder %s450, %s453
    %p462 = scmp.eq.s32.totalorder %s27, 3
    %p463 = por %p461, %p462
    %p464 = scmp.ne.s32.totalorder %s453, %s454
    %p465 = scmp.eq.s32.totalorder %s27, 0
    %p466 = por %p464, %p465
    %p467 = scmp.ne.s32.totalorder %s453, %s454
    %p468 = scmp.eq.s32.totalorder %s28, 3
    %p469 = por %p467, %p468
    %p471 = scmp.ne.s32.totalorder %s454, %s470
    %p472 = scmp.eq.s32.totalorder %s28, 0
    %p473 = por %p471, %p472
    %p474 = scmp.le.s32.totalorder 1, %s22
    %p475 = scmp.lt.s32.totalorder %s22, 5
    %p476 = pnand %p474, %p475
    %p477 = pneg %p476
    // Predicated region
    $region9: #{simcse_forward.2} parent=5 // pred_check
      _
    $region10: #{simcse_forward.2} parent=5 // pred_check_branch
      %479 = sbr.rel (%p476) target = $region12
    $region11: #{simcse_forward.2} parent=5 // pred_region
      %s480 = ssub.s32 %s22, 1
      // Predicated region
      $region13: #{simcse_forward.2} parent=11 // pred_check
        %p481 = pneg %p107
      $region14: #{simcse_forward.2} parent=11 // pred_check_branch
        %483 = sbr.rel (%p481) target = $region16
      $region15: #{simcse_forward.2} parent=11 // pred_region
        _
      $region16: #{simcse_forward.2} parent=11 // pred_fallthru
        _
      // Predicated region
      $region17: #{simcse_forward.2} parent=11 // pred_check
        %p484 = pneg %p128
      $region18: #{simcse_forward.2} parent=11 // pred_check_branch
        %486 = sbr.rel (%p484) target = $region20
      $region19: #{simcse_forward.2} parent=11 // pred_region
        _
      $region20: #{simcse_forward.2} parent=11 // pred_fallthru
        _
    $region12: #{simcse_forward.2} parent=5 // pred_fallthru
      _
    %p487 = scmp.lt.s32.totalorder %s22, 4
    // Predicated region
    $region21: #{simcse_forward.2} parent=5 // pred_check
      %p488 = pneg %p487
    $region22: #{simcse_forward.2} parent=5 // pred_check_branch
      %490 = sbr.rel (%p488) target = $region24
    $region23: #{simcse_forward.2} parent=5 // pred_region
      // Predicated region
      $region25: #{simcse_forward.2} parent=23 // pred_check
        %p491 = pneg %p54
      $region26: #{simcse_forward.2} parent=23 // pred_check_branch
        %493 = sbr.rel (%p491) target = $region28
      $region27: #{simcse_forward.2} parent=23 // pred_region
        %p494 = scmp.lt.s32.totalorder %s29, 1
        %s495 = scalar_select %p494, %s29, 1
        %s496 = smul.addr %s495, 8
        %s497 = scalar_lea.vmem %s0, %s496
      $region28: #{simcse_forward.2} parent=23 // pred_fallthru
        _
      // Predicated region
      $region29: #{simcse_forward.2} parent=23 // pred_check
        %p498 = pneg %p80
      $region30: #{simcse_forward.2} parent=23 // pred_check_branch
        %500 = sbr.rel (%p498) target = $region32
      $region31: #{simcse_forward.2} parent=23 // pred_region
        %p501 = scmp.lt.s32.totalorder %s29, 1
        %s502 = scalar_select %p501, %s29, 1
        %s503 = scalar_lea.vmem %s1, %s502
      $region32: #{simcse_forward.2} parent=23 // pred_fallthru
        _
      // Predicated region
      $region33: #{simcse_forward.2} parent=23 // pred_check
        %p504 = pneg %p148
      $region34: #{simcse_forward.2} parent=23 // pred_check_branch
        %506 = sbr.rel (%p504) target = $region36
      $region35: #{simcse_forward.2} parent=23 // pred_region
        %p507 = scmp.lt.s32.totalorder %s30, 1
        %s508 = scalar_select %p507, %s30, 1
        %s509 = smul.addr %s508, 4
        %s510 = smul.addr %s509, 4
        %s511 = scalar_lea.vmem %s4, %s510
      $region36: #{simcse_forward.2} parent=23 // pred_fallthru
        _
      // Predicated region
      $region37: #{simcse_forward.2} parent=23 // pred_check
        %p512 = pneg %p174
      $region38: #{simcse_forward.2} parent=23 // pred_check_branch
        %514 = sbr.rel (%p512) target = $region40
      $region39: #{simcse_forward.2} parent=23 // pred_region
        %p515 = scmp.lt.s32.totalorder %s30, 1
        %s516 = scalar_select %p515, %s30, 1
        %s517 = scalar_lea.vmem %s5, %s516
      $region40: #{simcse_forward.2} parent=23 // pred_fallthru
        _
      // Predicated region
      $region41: #{simcse_forward.2} parent=23 // pred_check
        %p518 = pneg %p200
      $region42: #{simcse_forward.2} parent=23 // pred_check_branch
        %520 = sbr.rel (%p518) target = $region44
      $region43: #{simcse_forward.2} parent=23 // pred_region
        %p521 = scmp.lt.s32.totalorder %s30, 1
        %s522 = scalar_select %p521, %s30, 1
        %s523 = smul.addr %s522, 4
        %s524 = smul.addr %s523, 4
        %s525 = scalar_lea.vmem %s6, %s524
      $region44: #{simcse_forward.2} parent=23 // pred_fallthru
        _
      // Predicated region
      $region45: #{simcse_forward.2} parent=23 // pred_check
        %p526 = pneg %p226
      $region46: #{simcse_forward.2} parent=23 // pred_check_branch
        %528 = sbr.rel (%p526) target = $region48
      $region47: #{simcse_forward.2} parent=23 // pred_region
        %p529 = scmp.lt.s32.totalorder %s30, 1
        %s530 = scalar_select %p529, %s30, 1
        %s531 = scalar_lea.vmem %s7, %s530
      $region48: #{simcse_forward.2} parent=23 // pred_fallthru
        _
      // Predicated region
      $region49: #{simcse_forward.2} parent=23 // pred_check
        %p532 = pneg %p252
      $region50: #{simcse_forward.2} parent=23 // pred_check_branch
        %534 = sbr.rel (%p532) target = $region52
      $region51: #{simcse_forward.2} parent=23 // pred_region
        %p535 = scmp.lt.s32.totalorder %s30, 1
        %s536 = scalar_select %p535, %s30, 1
        %s537 = scalar_lea.vmem %s8, %s536
      $region52: #{simcse_forward.2} parent=23 // pred_fallthru
        _
      // Predicated region
      $region53: #{simcse_forward.2} parent=23 // pred_check
        %p538 = pneg %p278
      $region54: #{simcse_forward.2} parent=23 // pred_check_branch
        %540 = sbr.rel (%p538) target = $region56
      $region55: #{simcse_forward.2} parent=23 // pred_region
        %p541 = scmp.lt.s32.totalorder %s30, 1
        %s542 = scalar_select %p541, %s30, 1
        %s543 = scalar_lea.vmem %s9, %s542
      $region56: #{simcse_forward.2} parent=23 // pred_fallthru
        _
      // Predicated region
      $region57: #{simcse_forward.2} parent=23 // pred_check
        %p544 = pneg %p304
      $region58: #{simcse_forward.2} parent=23 // pred_check_branch
        %546 = sbr.rel (%p544) target = $region60
      $region59: #{simcse_forward.2} parent=23 // pred_region
        %p547 = scmp.lt.s32.totalorder %s30, 1
        %s548 = scalar_select %p547, %s30, 1
        %s549 = smul.addr %s548, 4
        %s550 = smul.addr %s549, 4
        %s551 = scalar_lea.vmem %s10, %s550
      $region60: #{simcse_forward.2} parent=23 // pred_fallthru
        _
      // Predicated region
      $region61: #{simcse_forward.2} parent=23 // pred_check
        %p552 = pneg %p330
      $region62: #{simcse_forward.2} parent=23 // pred_check_branch
        %554 = sbr.rel (%p552) target = $region64
      $region63: #{simcse_forward.2} parent=23 // pred_region
        %p555 = scmp.lt.s32.totalorder %s30, 1
        %s556 = scalar_select %p555, %s30, 1
        %s557 = scalar_lea.vmem %s11, %s556
      $region64: #{simcse_forward.2} parent=23 // pred_fallthru
        _
      // Predicated region
      $region65: #{simcse_forward.2} parent=23 // pred_check
        %p558 = pneg %p356
      $region66: #{simcse_forward.2} parent=23 // pred_check_branch
        %560 = sbr.rel (%p558) target = $region68
      $region67: #{simcse_forward.2} parent=23 // pred_region
        %p561 = scmp.lt.s32.totalorder %s30, 1
        %s562 = scalar_select %p561, %s30, 1
        %s563 = smul.addr %s562, 8
        %s564 = smul.addr %s563, 4
        %s565 = scalar_lea.vmem %s12, %s564
      $region68: #{simcse_forward.2} parent=23 // pred_fallthru
        _
      // Predicated region
      $region69: #{simcse_forward.2} parent=23 // pred_check
        %p566 = pneg %p382
      $region70: #{simcse_forward.2} parent=23 // pred_check_branch
        %568 = sbr.rel (%p566) target = $region72
      $region71: #{simcse_forward.2} parent=23 // pred_region
        %p569 = scmp.lt.s32.totalorder %s30, 1
        %s570 = scalar_select %p569, %s30, 1
        %s571 = scalar_lea.vmem %s13, %s570
      $region72: #{simcse_forward.2} parent=23 // pred_fallthru
        _
      // Predicated region
      $region73: #{simcse_forward.2} parent=23 // pred_check
        %p572 = pneg %p408
      $region74: #{simcse_forward.2} parent=23 // pred_check_branch
        %574 = sbr.rel (%p572) target = $region76
      $region75: #{simcse_forward.2} parent=23 // pred_region
        %p575 = scmp.lt.s32.totalorder %s30, 1
        %s576 = scalar_select %p575, %s30, 1
        %s577 = scalar_lea.vmem %s14, %s576
      $region76: #{simcse_forward.2} parent=23 // pred_fallthru
        _
      // Predicated region
      $region77: #{simcse_forward.2} parent=23 // pred_check
        %p578 = pneg %p434
      $region78: #{simcse_forward.2} parent=23 // pred_check_branch
        %580 = sbr.rel (%p578) target = $region80
      $region79: #{simcse_forward.2} parent=23 // pred_region
        %p581 = scmp.lt.s32.totalorder %s30, 1
        %s582 = scalar_select %p581, %s30, 1
        %s583 = scalar_lea.vmem %s15, %s582
      $region80: #{simcse_forward.2} parent=23 // pred_fallthru
        _
    $region24: #{simcse_forward.2} parent=5 // pred_fallthru
      _
    %p584 = scmp.le.s32.totalorder 1, %s22
    %p585 = scmp.lt.s32.totalorder %s22, 5
    %p586 = pnand %p584, %p585
    %p587 = pneg %p586
    // Predicated region
    $region81: #{simcse_forward.2} parent=5 // pred_check
      _
    $region82: #{simcse_forward.2} parent=5 // pred_check_branch
      %589 = sbr.rel (%p586) target = $region84
    $region83: #{simcse_forward.2} parent=5 // pred_region
      %s590 = ssub.s32 %s22, 1
      %p591 = scmp.lt.s32.totalorder %s31, 1
      %s592 = scalar_select %p591, %s31, 1
      %s593 = smul.addr %s592, 8
      %s594 = scalar_lea.vmem %s0, %s593
      %p595 = pneg %p60
      %p596 = pneg %p57
      %p597 = scmp.lt.s32.totalorder %s31, 1
      %s598 = scalar_select %p597, %s31, 1
      %s599 = scalar_lea.vmem %s1, %s598
      %p600 = pneg %p86
      %p601 = pneg %p83
      %p602 = pneg %p107
      %p603 = pneg %p104
      %p604 = pneg %p128
      %p605 = pneg %p125
      %p606 = scmp.lt.s32.totalorder %s32, 1
      %s607 = scalar_select %p606, %s32, 1
      %s608 = smul.addr %s607, 4
      %s609 = smul.addr %s608, 4
      %s610 = scalar_lea.vmem %s4, %s609
      %p611 = pneg %p154
      %p612 = pneg %p151
      %p613 = scmp.lt.s32.totalorder %s32, 1
      %s614 = scalar_select %p613, %s32, 1
      %s615 = scalar_lea.vmem %s5, %s614
      %p616 = pneg %p180
      %p617 = pneg %p177
      %p618 = scmp.lt.s32.totalorder %s32, 1
      %s619 = scalar_select %p618, %s32, 1
      %s620 = smul.addr %s619, 4
      %s621 = smul.addr %s620, 4
      %s622 = scalar_lea.vmem %s6, %s621
      %p623 = pneg %p206
      %p624 = pneg %p203
      %p625 = scmp.lt.s32.totalorder %s32, 1
      %s626 = scalar_select %p625, %s32, 1
      %s627 = scalar_lea.vmem %s7, %s626
      %p628 = pneg %p232
      %p629 = pneg %p229
      %p630 = scmp.lt.s32.totalorder %s32, 1
      %s631 = scalar_select %p630, %s32, 1
      %s632 = scalar_lea.vmem %s8, %s631
      %p633 = pneg %p258
      %p634 = pneg %p255
      %p635 = scmp.lt.s32.totalorder %s32, 1
      %s636 = scalar_select %p635, %s32, 1
      %s637 = scalar_lea.vmem %s9, %s636
      %p638 = pneg %p284
      %p639 = pneg %p281
      %p640 = scmp.lt.s32.totalorder %s32, 1
      %s641 = scalar_select %p640, %s32, 1
      %s642 = smul.addr %s641, 4
      %s643 = smul.addr %s642, 4
      %s644 = scalar_lea.vmem %s10, %s643
      %p645 = pneg %p310
      %p646 = pneg %p307
      %p647 = scmp.lt.s32.totalorder %s32, 1
      %s648 = scalar_select %p647, %s32, 1
      %s649 = scalar_lea.vmem %s11, %s648
      %p650 = pneg %p336
      %p651 = pneg %p333
      %p652 = scmp.lt.s32.totalorder %s32, 1
      %s653 = scalar_select %p652, %s32, 1
      %s654 = smul.addr %s653, 8
      %s655 = smul.addr %s654, 4
      %s656 = scalar_lea.vmem %s12, %s655
      %p657 = pneg %p362
      %p658 = pneg %p359
      %p659 = scmp.lt.s32.totalorder %s32, 1
      %s660 = scalar_select %p659, %s32, 1
      %s661 = scalar_lea.vmem %s13, %s660
      %p662 = pneg %p388
      %p663 = pneg %p385
      %p664 = scmp.lt.s32.totalorder %s32, 1
      %s665 = scalar_select %p664, %s32, 1
      %s666 = scalar_lea.vmem %s14, %s665
      %p667 = pneg %p414
      %p668 = pneg %p411
      %p669 = scmp.lt.s32.totalorder %s32, 1
      %s670 = scalar_select %p669, %s32, 1
      %s671 = scalar_lea.vmem %s15, %s670
      %p672 = pneg %p440
      %p673 = pneg %p437
      %p674 = pneg %p466
      %p675 = pneg %p463
      %p676 = scmp.lt.s32.totalorder %s31, 1
      %s677 = scalar_select %p676, %s31, 1
      %s678 = smul.addr %s677, 8
      %s679 = scalar_lea.vmem %s16, %s678
      %p680 = scmp.lt.s32.totalorder %s31, 1
      %s681 = scalar_select %p680, %s31, 1
      %s682 = smul.addr %s681, 8
      %s683 = scalar_lea.vmem %s0, %s682
      %p684 = scmp.lt.s32.totalorder %s31, 1
      %s685 = scalar_select %p684, %s31, 1
      %s686 = scalar_lea.vmem %s1, %s685
      %p687 = scmp.lt.s32.totalorder %s32, 1
      %s688 = scalar_select %p687, %s32, 1
      %s689 = smul.addr %s688, 4
      %s690 = smul.addr %s689, 4
      %s691 = scalar_lea.vmem %s4, %s690
      %p692 = scmp.lt.s32.totalorder %s32, 1
      %s693 = scalar_select %p692, %s32, 1
      %s694 = scalar_lea.vmem %s5, %s693
      %p695 = scmp.lt.s32.totalorder %s32, 1
      %s696 = scalar_select %p695, %s32, 1
      %s697 = smul.addr %s696, 4
      %s698 = smul.addr %s697, 4
      %s699 = scalar_lea.vmem %s6, %s698
      %p700 = scmp.lt.s32.totalorder %s32, 1
      %s701 = scalar_select %p700, %s32, 1
      %s702 = scalar_lea.vmem %s7, %s701
      %p703 = scmp.lt.s32.totalorder %s32, 1
      %s704 = scalar_select %p703, %s32, 1
      %s705 = scalar_lea.vmem %s8, %s704
      %p706 = scmp.lt.s32.totalorder %s32, 1
      %s707 = scalar_select %p706, %s32, 1
      %s708 = scalar_lea.vmem %s9, %s707
      %p709 = scmp.lt.s32.totalorder %s32, 1
      %s710 = scalar_select %p709, %s32, 1
      %s711 = smul.addr %s710, 4
      %s712 = smul.addr %s711, 4
      %s713 = scalar_lea.vmem %s10, %s712
      %p714 = scmp.lt.s32.totalorder %s32, 1
      %s715 = scalar_select %p714, %s32, 1
      %s716 = scalar_lea.vmem %s11, %s715
      %p717 = scmp.lt.s32.totalorder %s32, 1
      %s718 = scalar_select %p717, %s32, 1
      %s719 = smul.addr %s718, 8
      %s720 = smul.addr %s719, 4
      %s721 = scalar_lea.vmem %s12, %s720
      %p722 = scmp.lt.s32.totalorder %s32, 1
      %s723 = scalar_select %p722, %s32, 1
      %s724 = scalar_lea.vmem %s13, %s723
      %p725 = scmp.lt.s32.totalorder %s32, 1
      %s726 = scalar_select %p725, %s32, 1
      %s727 = scalar_lea.vmem %s14, %s726
      %p728 = scmp.lt.s32.totalorder %s32, 1
      %s729 = scalar_select %p728, %s32, 1
      %s730 = scalar_lea.vmem %s15, %s729
      %p731 = scmp.lt.s32.totalorder %s31, 1
      %s732 = scalar_select %p731, %s31, 1
      %s733 = smul.addr %s732, 8
      %s734 = scalar_lea.vmem %s16, %s733
      %p736 = scmp.eq.s32.totalorder %s32, 0
      // Predicated region
      $region85: #{simcse_forward.2} parent=83 // pred_check
        %p737 = pneg %p736
      $region86: #{simcse_forward.2} parent=83 // pred_check_branch
        %739 = sbr.rel (%p737) target = $region88
      $region87: #{simcse_forward.2} parent=83 // pred_region
        %v740 = vld [vmem:[%s683] sm:$0xff]
        %v741 = vld [vmem:[%s2] sm:$0x1]
        %v742 = vld [vmem:[%s3] sm:$0x1]
        %vm743 = vcmask 261120
        %v744 = vsel %vm743, %v740, 0.0
        %745 = vadd.xlane.f32.xlu0 %v744
        %v746 = vpop.xlane.xlu0 %745
        %v747 = vrcp.pop 32.0
        %v748 = vmul.f32 %v746, %v747
        %v749 = vsub.f32 %v740, %v748
        %v750 = vmul.f32 %v749, %v749
        %v751 = vsel %vm743, %v750, 0.0
        %752 = vadd.xlane.f32.xlu0 %v751
        %v753 = vpop.xlane.xlu0 %752
        %v754 = vmul.f32 %v753, %v747
        %v755 = vadd.f32 %v754, 1e-12
        %v756 = vrsqrt.pop %v755
        %v757 = vmul.f32 %v749, %v756
        %v759 = vlaneseq
        %v760 = vshrl.u32 %v759, 7
        %v761 = vsub.s32 0, %v760
        %v762 = vrot.slane %v741, %v761
        %v764 = vmul.f32 %v757, %v762
        %v766 = vlaneseq
        %v767 = vshrl.u32 %v766, 7
        %v768 = vsub.s32 0, %v767
        %v769 = vrot.slane %v742, %v768
        %v771 = vadd.f32 %v764, %v769
        %772 = vst.msk [vmem:[%s734] sm:$0xff] %vm743, %v771
      $region88: #{simcse_forward.2} parent=83 // pred_fallthru
        _
      %v773 = vld [vmem:[%s734] sm:$0xff]
      %v774 = vld [vmem:[%s686] sm:$0x1]
      %v775 = vpack.c.bf16 %v773, %v773
      %v776 = vld [vmem:[%s691] sm:$0xf]
      %v777 = vld [vmem:[%s691 + $0x4] sm:$0xf]
      %v778 = vld [vmem:[%s691 + $0x8] sm:$0xf]
      %v779 = vld [vmem:[%s691 + $0xc] sm:$0xf]
      %v780 = vld [vmem:[%s694] sm:$0x1]
      %v782 = vlaneseq
      %v783 = vshrl.u32 %v782, 7
      %v784 = vsub.s32 0, %v783
      %v785 = vrot.slane %v780, %v784
      %v791 = vunpack.c.l.b16 %v776
      %v792 = vunpack.c.l.b16 %v777
      %v793 = vunpack.c.l.b16 %v778
      %v794 = vunpack.c.l.b16 %v779
      %v795 = vpack.c.b16 %v792, %v791
      %v796 = vpack.c.b16 %v794, %v793
      %vm799 = vcmask 261120
      %v801 = vsel %vm799, %v775, 0
      %803 = vmatprep.subr.bf16.mxu0 0
      %804 = vmatpush1.bf16.msra.mxu0 0
      %805 = vmatprep.subr.bf16.mxu0 0
      %806 = vmatpush1.bf16.msra.mxu0 0
      %807 = vmatprep.subr.bf16.mxu0 0
      %808 = vmatpush1.bf16.msra.mxu0 0
      %809 = vmatprep.subr.bf16.mxu0 0
      %810 = vmatpush1.bf16.msra.mxu0 0
      %811 = vmatprep.subr.bf16.mxu0 0
      %812 = vmatpush1.bf16.msra.mxu0 0
      %813 = vmatprep.subr.bf16.mxu0 0
      %814 = vmatpush1.bf16.msra.mxu0 0
      %815 = vmatprep.subr.bf16.mxu0 0
      %816 = vmatpush1.bf16.msra.mxu0 %v796
      %817 = vmatprep.subr.bf16.mxu0 0
      %818 = vmatpush1.bf16.msra.mxu0 %v795
      %819 = vmatprep.subr.bf16.mxu0 0
      %820 = vmatpush2.bf16.msra.mxu0 0
      %821 = vmatprep.subr.bf16.mxu0 0
      %822 = vmatpush2.bf16.msra.mxu0 0
      %823 = vmatprep.subr.bf16.mxu0 0
      %824 = vmatpush2.bf16.msra.mxu0 0
      %825 = vmatprep.subr.bf16.mxu0 0
      %826 = vmatpush2.bf16.msra.mxu0 0
      %827 = vmatprep.subr.bf16.mxu0 0
      %828 = vmatpush2.bf16.msra.mxu0 0
      %829 = vmatprep.subr.bf16.mxu0 0
      %830 = vmatpush2.bf16.msra.mxu0 0
      %831 = vmatprep.subr.bf16.mxu0 0
      %832 = vmatpush2.bf16.msra.mxu0 0
      %833 = vmatprep.subr.bf16.mxu0 0
      %834 = vmatpush2.bf16.msra.mxu0 0
      %835 = vmatprep.mubr.bf16.mxu0 0
      %836 = vmatmul.mubr.bf16.gmra.mxu0 %v801
      %v837 = vpop.f32.mrf.mxu0
      %v838 = vadd.f32 %v785, %v837
      %v839 = vpop.f32.mrf.mxu0
      %v840 = vpop.f32.mrf.mxu0
      %v841 = vpop.f32.mrf.mxu0
      %842 = vdwg.mxu0
      %v843 = vld [vmem:[%s699] sm:$0xf]
      %v844 = vld [vmem:[%s699 + $0x4] sm:$0xf]
      %v845 = vld [vmem:[%s699 + $0x8] sm:$0xf]
      %v846 = vld [vmem:[%s699 + $0xc] sm:$0xf]
      %v847 = vpack.c.bf16 %v838, %v838
      %849 = vrot.lane.b32.xlu0 %v847, 96
      %v850 = vpop.permute.xlu0 %849
      %vm851 = vcmask 64512
      %v853 = vsel %vm851, %v847, 0
      %v856 = vsel %vm851, %v850, 0
      %858 = vmatprep.subr.bf16.mxu0 0
      %859 = vmatpush1.bf16.xpose.msra.mxu0 0
      %860 = vmatprep.subr.bf16.mxu0 0
      %861 = vmatpush1.bf16.xpose.msra.mxu0 0
      %862 = vmatprep.subr.bf16.mxu0 0
      %863 = vmatpush1.bf16.xpose.msra.mxu0 0
      %864 = vmatprep.subr.bf16.mxu0 0
      %865 = vmatpush1.bf16.xpose.msra.mxu0 0
      %866 = vmatprep.subr.bf16.mxu0 0
      %867 = vmatpush1.bf16.xpose.msra.mxu0 0
      %868 = vmatprep.subr.bf16.mxu0 0
      %869 = vmatpush1.bf16.xpose.msra.mxu0 0
      %870 = vmatprep.subr.bf16.mxu0 0
      %871 = vmatpush1.bf16.xpose.msra.mxu0 0
      %872 = vmatprep.subr.bf16.mxu0 0
      %873 = vmatpush1.bf16.xpose.msra.mxu0 %v856
      %874 = vmatprep.subr.bf16.mxu0 0
      %875 = vmatpush2.bf16.xpose.msra.mxu0 0
      %876 = vmatprep.subr.bf16.mxu0 0
      %877 = vmatpush2.bf16.xpose.msra.mxu0 0
      %878 = vmatprep.subr.bf16.mxu0 0
      %879 = vmatpush2.bf16.xpose.msra.mxu0 0
      %880 = vmatprep.subr.bf16.mxu0 0
      %881 = vmatpush2.bf16.xpose.msra.mxu0 0
      %882 = vmatprep.subr.bf16.mxu0 0
      %883 = vmatpush2.bf16.xpose.msra.mxu0 0
      %884 = vmatprep.subr.bf16.mxu0 0
      %885 = vmatpush2.bf16.xpose.msra.mxu0 0
      %886 = vmatprep.subr.bf16.mxu0 0
      %887 = vmatpush2.bf16.xpose.msra.mxu0 0
      %888 = vmatprep.subr.bf16.mxu0 0
      %889 = vmatpush2.bf16.xpose.msra.mxu0 0
      %890 = vmatprep.mubr.bf16.mxu0 0
      %891 = vmatmul.mubr.bf16.gmra.mxu0 %v853
      %v892 = vpop.f32.mrf.mxu0
      %v893 = vadd.f32 0.0, %v892
      %v894 = vpop.f32.mrf.mxu0
      %v895 = vpop.f32.mrf.mxu0
      %v896 = vpop.f32.mrf.mxu0
      %897 = vdwg.mxu0
      %v898 = vmul.f32 %v893, 0.35355338
      %v900 = vlaneseq
      %v901 = vshrl.u32 %v900, 7
      %v902 = vsub.s32 0, %v901
      %v903 = vrot.slane %v774, %v902
      %v905 = vadd.f32 %v898, %v903
      %v906 = vsel %vm851, %v905, -inf
      %907 = vmax.xlane.f32.xlu0 %v906
      %v908 = vpop.xlane.xlu0 %907
      %v909 = vsub.f32 %v905, %v908
      %v910 = vmul.f32 %v909, 1.442695
      %v911 = vpow.pop %v910
      %v912 = vsel %vm851, %v911, 0.0
      %913 = vadd.xlane.f32.xlu0 %v912
      %v914 = vpop.xlane.xlu0 %913
      %v915 = vrcp.pop %v914
      %v916 = vmul.f32 %v911, %v915
      %v917 = vpack.c.bf16 %v916, %v916
      %918 = vrot.lane.b32.xlu0 %v847, 64
      %v919 = vpop.permute.xlu0 %918
      %v921 = vsel %vm851, %v917, 0
      %vm923 = vcmask 1043456
      %v925 = vsel %vm923, %v919, 0
      %927 = vmatprep.subr.bf16.mxu0 0
      %928 = vmatpush1.bf16.msra.mxu0 0
      %929 = vmatprep.subr.bf16.mxu0 0
      %930 = vmatpush1.bf16.msra.mxu0 0
      %931 = vmatprep.subr.bf16.mxu0 0
      %932 = vmatpush1.bf16.msra.mxu0 0
      %933 = vmatprep.subr.bf16.mxu0 0
      %934 = vmatpush1.bf16.msra.mxu0 0
      %935 = vmatprep.subr.bf16.mxu0 0
      %936 = vmatpush1.bf16.msra.mxu0 0
      %937 = vmatprep.subr.bf16.mxu0 0
      %938 = vmatpush1.bf16.msra.mxu0 0
      %939 = vmatprep.subr.bf16.mxu0 0
      %940 = vmatpush1.bf16.msra.mxu0 0
      %941 = vmatprep.subr.bf16.mxu0 0
      %942 = vmatpush1.bf16.msra.mxu0 %v925
      %943 = vmatprep.subr.bf16.mxu0 0
      %944 = vmatpush2.bf16.msra.mxu0 0
      %945 = vmatprep.subr.bf16.mxu0 0
      %946 = vmatpush2.bf16.msra.mxu0 0
      %947 = vmatprep.subr.bf16.mxu0 0
      %948 = vmatpush2.bf16.msra.mxu0 0
      %949 = vmatprep.subr.bf16.mxu0 0
      %950 = vmatpush2.bf16.msra.mxu0 0
      %951 = vmatprep.subr.bf16.mxu0 0
      %952 = vmatpush2.bf16.msra.mxu0 0
      %953 = vmatprep.subr.bf16.mxu0 0
      %954 = vmatpush2.bf16.msra.mxu0 0
      %955 = vmatprep.subr.bf16.mxu0 0
      %956 = vmatpush2.bf16.msra.mxu0 0
      %957 = vmatprep.subr.bf16.mxu0 0
      %958 = vmatpush2.bf16.msra.mxu0 0
      %959 = vmatprep.mubr.bf16.mxu0 0
      %960 = vmatmul.mubr.bf16.gmra.mxu0 %v921
      %v961 = vpop.f32.mrf.mxu0
      %v962 = vadd.f32 0.0, %v961
      %v963 = vpop.f32.mrf.mxu0
      %v964 = vpop.f32.mrf.mxu0
      %v965 = vpop.f32.mrf.mxu0
      %966 = vdwg.mxu0
      %v967 = vpack.c.bf16 %v962, %v962
      %968 = vrot.lane.b32.xlu0 %v847, 120
      %v969 = vpop.permute.xlu0 %968
      %970 = vrot.lane.b32.xlu0 %v847, 88
      %v971 = vpop.permute.xlu0 %970
      %v973 = vsel %vm851, %v969, 0
      %v976 = vsel %vm851, %v971, 0
      %978 = vmatprep.subr.bf16.mxu0 0
      %979 = vmatpush1.bf16.xpose.msra.mxu0 0
      %980 = vmatprep.subr.bf16.mxu0 0
      %981 = vmatpush1.bf16.xpose.msra.mxu0 0
      %982 = vmatprep.subr.bf16.mxu0 0
      %983 = vmatpush1.bf16.xpose.msra.mxu0 0
      %984 = vmatprep.subr.bf16.mxu0 0
      %985 = vmatpush1.bf16.xpose.msra.mxu0 0
      %986 = vmatprep.subr.bf16.mxu0 0
      %987 = vmatpush1.bf16.xpose.msra.mxu0 0
      %988 = vmatprep.subr.bf16.mxu0 0
      %989 = vmatpush1.bf16.xpose.msra.mxu0 0
      %990 = vmatprep.subr.bf16.mxu0 0
      %991 = vmatpush1.bf16.xpose.msra.mxu0 0
      %992 = vmatprep.subr.bf16.mxu0 0
      %993 = vmatpush1.bf16.xpose.msra.mxu0 %v976
      %994 = vmatprep.subr.bf16.mxu0 0
      %995 = vmatpush2.bf16.xpose.msra.mxu0 0
      %996 = vmatprep.subr.bf16.mxu0 0
      %997 = vmatpush2.bf16.xpose.msra.mxu0 0
      %998 = vmatprep.subr.bf16.mxu0 0
      %999 = vmatpush2.bf16.xpose.msra.mxu0 0
      %1000 = vmatprep.subr.bf16.mxu0 0
      %1001 = vmatpush2.bf16.xpose.msra.mxu0 0
      %1002 = vmatprep.subr.bf16.mxu0 0
      %1003 = vmatpush2.bf16.xpose.msra.mxu0 0
      %1004 = vmatprep.subr.bf16.mxu0 0
      %1005 = vmatpush2.bf16.xpose.msra.mxu0 0
      %1006 = vmatprep.subr.bf16.mxu0 0
      %1007 = vmatpush2.bf16.xpose.msra.mxu0 0
      %1008 = vmatprep.subr.bf16.mxu0 0
      %1009 = vmatpush2.bf16.xpose.msra.mxu0 0
      %1010 = vmatprep.mubr.bf16.mxu0 0
      %1011 = vmatmul.mubr.bf16.gmra.mxu0 %v973
      %v1012 = vpop.f32.mrf.mxu0
      %v1013 = vadd.f32 0.0, %v1012
      %v1014 = vpop.f32.mrf.mxu0
      %v1015 = vpop.f32.mrf.mxu0
      %v1016 = vpop.f32.mrf.mxu0
      %1017 = vdwg.mxu0
      %v1018 = vmul.f32 %v1013, 0.35355338
      %v1019 = vadd.f32 %v1018, %v903
      %v1020 = vsel %vm851, %v1019, -inf
      %1021 = vmax.xlane.f32.xlu0 %v1020
      %v1022 = vpop.xlane.xlu0 %1021
      %v1023 = vsub.f32 %v1019, %v1022
      %v1024 = vmul.f32 %v1023, 1.442695
      %v1025 = vpow.pop %v1024
      %v1026 = vsel %vm851, %v1025, 0.0
      %1027 = vadd.xlane.f32.xlu0 %v1026
      %v1028 = vpop.xlane.xlu0 %1027
      %v1029 = vrcp.pop %v1028
      %v1030 = vmul.f32 %v1025, %v1029
      %v1031 = vpack.c.bf16 %v1030, %v1030
      %1032 = vrot.lane.b32.xlu0 %v847, 56
      %v1033 = vpop.permute.xlu0 %1032
      %v1035 = vsel %vm851, %v1031, 0
      %v1038 = vsel %vm923, %v1033, 0
      %1040 = vmatprep.subr.bf16.mxu0 0
      %1041 = vmatpush1.bf16.msra.mxu0 0
      %1042 = vmatprep.subr.bf16.mxu0 0
      %1043 = vmatpush1.bf16.msra.mxu0 0
      %1044 = vmatprep.subr.bf16.mxu0 0
      %1045 = vmatpush1.bf16.msra.mxu0 0
      %1046 = vmatprep.subr.bf16.mxu0 0
      %1047 = vmatpush1.bf16.msra.mxu0 0
      %1048 = vmatprep.subr.bf16.mxu0 0
      %1049 = vmatpush1.bf16.msra.mxu0 0
      %1050 = vmatprep.subr.bf16.mxu0 0
      %1051 = vmatpush1.bf16.msra.mxu0 0
      %1052 = vmatprep.subr.bf16.mxu0 0
      %1053 = vmatpush1.bf16.msra.mxu0 0
      %1054 = vmatprep.subr.bf16.mxu0 0
      %1055 = vmatpush1.bf16.msra.mxu0 %v1038
      %1056 = vmatprep.subr.bf16.mxu0 0
      %1057 = vmatpush2.bf16.msra.mxu0 0
      %1058 = vmatprep.subr.bf16.mxu0 0
      %1059 = vmatpush2.bf16.msra.mxu0 0
      %1060 = vmatprep.subr.bf16.mxu0 0
      %1061 = vmatpush2.bf16.msra.mxu0 0
      %1062 = vmatprep.subr.bf16.mxu0 0
      %1063 = vmatpush2.bf16.msra.mxu0 0
      %1064 = vmatprep.subr.bf16.mxu0 0
      %1065 = vmatpush2.bf16.msra.mxu0 0
      %1066 = vmatprep.subr.bf16.mxu0 0
      %1067 = vmatpush2.bf16.msra.mxu0 0
      %1068 = vmatprep.subr.bf16.mxu0 0
      %1069 = vmatpush2.bf16.msra.mxu0 0
      %1070 = vmatprep.subr.bf16.mxu0 0
      %1071 = vmatpush2.bf16.msra.mxu0 0
      %1072 = vmatprep.mubr.bf16.mxu0 0
      %1073 = vmatmul.mubr.bf16.gmra.mxu0 %v1035
      %v1074 = vpop.f32.mrf.mxu0
      %v1075 = vadd.f32 0.0, %v1074
      %v1076 = vpop.f32.mrf.mxu0
      %v1077 = vpop.f32.mrf.mxu0
      %v1078 = vpop.f32.mrf.mxu0
      %1079 = vdwg.mxu0
      %v1080 = vpack.c.bf16 %v1075, %v1075
      %v1082 = vsel %vm851, %v1080, 0
      %v1085 = vsel %vm923, %v844, 0
      %1087 = vmatprep.subr.bf16.mxu0 0
      %1088 = vmatpush1.bf16.msra.mxu0 0
      %1089 = vmatprep.subr.bf16.mxu0 0
      %1090 = vmatpush1.bf16.msra.mxu0 0
      %1091 = vmatprep.subr.bf16.mxu0 0
      %1092 = vmatpush1.bf16.msra.mxu0 0
      %1093 = vmatprep.subr.bf16.mxu0 0
      %1094 = vmatpush1.bf16.msra.mxu0 0
      %1095 = vmatprep.subr.bf16.mxu0 0
      %1096 = vmatpush1.bf16.msra.mxu0 0
      %1097 = vmatprep.subr.bf16.mxu0 0
      %1098 = vmatpush1.bf16.msra.mxu0 0
      %1099 = vmatprep.subr.bf16.mxu0 0
      %1100 = vmatpush1.bf16.msra.mxu0 0
      %1101 = vmatprep.subr.bf16.mxu0 0
      %1102 = vmatpush1.bf16.msra.mxu0 %v1085
      %1103 = vmatprep.subr.bf16.mxu0 0
      %1104 = vmatpush2.bf16.msra.mxu0 0
      %1105 = vmatprep.subr.bf16.mxu0 0
      %1106 = vmatpush2.bf16.msra.mxu0 0
      %1107 = vmatprep.subr.bf16.mxu0 0
      %1108 = vmatpush2.bf16.msra.mxu0 0
      %1109 = vmatprep.subr.bf16.mxu0 0
      %1110 = vmatpush2.bf16.msra.mxu0 0
      %1111 = vmatprep.subr.bf16.mxu0 0
      %1112 = vmatpush2.bf16.msra.mxu0 0
      %1113 = vmatprep.subr.bf16.mxu0 0
      %1114 = vmatpush2.bf16.msra.mxu0 0
      %1115 = vmatprep.subr.bf16.mxu0 0
      %1116 = vmatpush2.bf16.msra.mxu0 0
      %1117 = vmatprep.subr.bf16.mxu0 0
      %1118 = vmatpush2.bf16.msra.mxu0 0
      %1119 = vmatprep.mubr.bf16.mxu0 0
      %1120 = vmatmul.mubr.bf16.gmra.mxu0 %v1082
      %v1121 = vpop.f32.mrf.mxu0
      %v1122 = vadd.f32 0.0, %v1121
      %v1123 = vpop.f32.mrf.mxu0
      %v1124 = vpop.f32.mrf.mxu0
      %v1125 = vpop.f32.mrf.mxu0
      %1126 = vdwg.mxu0
      %v1128 = vsel %vm851, %v967, 0
      %v1131 = vsel %vm923, %v843, 0
      %1133 = vmatprep.subr.bf16.mxu0 0
      %1134 = vmatpush1.bf16.msra.mxu0 0
      %1135 = vmatprep.subr.bf16.mxu0 0
      %1136 = vmatpush1.bf16.msra.mxu0 0
      %1137 = vmatprep.subr.bf16.mxu0 0
      %1138 = vmatpush1.bf16.msra.mxu0 0
      %1139 = vmatprep.subr.bf16.mxu0 0
      %1140 = vmatpush1.bf16.msra.mxu0 0
      %1141 = vmatprep.subr.bf16.mxu0 0
      %1142 = vmatpush1.bf16.msra.mxu0 0
      %1143 = vmatprep.subr.bf16.mxu0 0
      %1144 = vmatpush1.bf16.msra.mxu0 0
      %1145 = vmatprep.subr.bf16.mxu0 0
      %1146 = vmatpush1.bf16.msra.mxu0 0
      %1147 = vmatprep.subr.bf16.mxu0 0
      %1148 = vmatpush1.bf16.msra.mxu0 %v1131
      %1149 = vmatprep.subr.bf16.mxu0 0
      %1150 = vmatpush2.bf16.msra.mxu0 0
      %1151 = vmatprep.subr.bf16.mxu0 0
      %1152 = vmatpush2.bf16.msra.mxu0 0
      %1153 = vmatprep.subr.bf16.mxu0 0
      %1154 = vmatpush2.bf16.msra.mxu0 0
      %1155 = vmatprep.subr.bf16.mxu0 0
      %1156 = vmatpush2.bf16.msra.mxu0 0
      %1157 = vmatprep.subr.bf16.mxu0 0
      %1158 = vmatpush2.bf16.msra.mxu0 0
      %1159 = vmatprep.subr.bf16.mxu0 0
      %1160 = vmatpush2.bf16.msra.mxu0 0
      %1161 = vmatprep.subr.bf16.mxu0 0
      %1162 = vmatpush2.bf16.msra.mxu0 0
      %1163 = vmatprep.subr.bf16.mxu0 0
      %1164 = vmatpush2.bf16.msra.mxu0 0
      %1165 = vmatprep.mubr.bf16.mxu0 0
      %1166 = vmatmul.mubr.bf16.gmra.mxu0 %v1128
      %v1167 = vpop.f32.mrf.mxu0
      %v1168 = vadd.f32 %v1122, %v1167
      %v1169 = vpop.f32.mrf.mxu0
      %v1170 = vpop.f32.mrf.mxu0
      %v1171 = vpop.f32.mrf.mxu0
      %1172 = vdwg.mxu0
      %1173 = vrot.lane.b32.xlu0 %v847, 112
      %v1174 = vpop.permute.xlu0 %1173
      %1175 = vrot.lane.b32.xlu0 %v847, 80
      %v1176 = vpop.permute.xlu0 %1175
      %v1178 = vsel %vm851, %v1174, 0
      %v1181 = vsel %vm851, %v1176, 0
      %1183 = vmatprep.subr.bf16.mxu0 0
      %1184 = vmatpush1.bf16.xpose.msra.mxu0 0
      %1185 = vmatprep.subr.bf16.mxu0 0
      %1186 = vmatpush1.bf16.xpose.msra.mxu0 0
      %1187 = vmatprep.subr.bf16.mxu0 0
      %1188 = vmatpush1.bf16.xpose.msra.mxu0 0
      %1189 = vmatprep.subr.bf16.mxu0 0
      %1190 = vmatpush1.bf16.xpose.msra.mxu0 0
      %1191 = vmatprep.subr.bf16.mxu0 0
      %1192 = vmatpush1.bf16.xpose.msra.mxu0 0
      %1193 = vmatprep.subr.bf16.mxu0 0
      %1194 = vmatpush1.bf16.xpose.msra.mxu0 0
      %1195 = vmatprep.subr.bf16.mxu0 0
      %1196 = vmatpush1.bf16.xpose.msra.mxu0 0
      %1197 = vmatprep.subr.bf16.mxu0 0
      %1198 = vmatpush1.bf16.xpose.msra.mxu0 %v1181
      %1199 = vmatprep.subr.bf16.mxu0 0
      %1200 = vmatpush2.bf16.xpose.msra.mxu0 0
      %1201 = vmatprep.subr.bf16.mxu0 0
      %1202 = vmatpush2.bf16.xpose.msra.mxu0 0
      %1203 = vmatprep.subr.bf16.mxu0 0
      %1204 = vmatpush2.bf16.xpose.msra.mxu0 0
      %1205 = vmatprep.subr.bf16.mxu0 0
      %1206 = vmatpush2.bf16.xpose.msra.mxu0 0
      %1207 = vmatprep.subr.bf16.mxu0 0
      %1208 = vmatpush2.bf16.xpose.msra.mxu0 0
      %1209 = vmatprep.subr.bf16.mxu0 0
      %1210 = vmatpush2.bf16.xpose.msra.mxu0 0
      %1211 = vmatprep.subr.bf16.mxu0 0
      %1212 = vmatpush2.bf16.xpose.msra.mxu0 0
      %1213 = vmatprep.subr.bf16.mxu0 0
      %1214 = vmatpush2.bf16.xpose.msra.mxu0 0
      %1215 = vmatprep.mubr.bf16.mxu0 0
      %1216 = vmatmul.mubr.bf16.gmra.mxu0 %v1178
      %v1217 = vpop.f32.mrf.mxu0
      %v1218 = vadd.f32 0.0, %v1217
      %v1219 = vpop.f32.mrf.mxu0
      %v1220 = vpop.f32.mrf.mxu0
      %v1221 = vpop.f32.mrf.mxu0
      %1222 = vdwg.mxu0
      %v1223 = vmul.f32 %v1218, 0.35355338
      %v1224 = vadd.f32 %v1223, %v903
      %v1225 = vsel %vm851, %v1224, -inf
      %1226 = vmax.xlane.f32.xlu0 %v1225
      %v1227 = vpop.xlane.xlu0 %1226
      %v1228 = vsub.f32 %v1224, %v1227
      %v1229 = vmul.f32 %v1228, 1.442695
      %v1230 = vpow.pop %v1229
      %v1231 = vsel %vm851, %v1230, 0.0
      %1232 = vadd.xlane.f32.xlu0 %v1231
      %v1233 = vpop.xlane.xlu0 %1232
      %v1234 = vrcp.pop %v1233
      %v1235 = vmul.f32 %v1230, %v1234
      %v1236 = vpack.c.bf16 %v1235, %v1235
      %1237 = vrot.lane.b32.xlu0 %v847, 48
      %v1238 = vpop.permute.xlu0 %1237
      %v1240 = vsel %vm851, %v1236, 0
      %v1243 = vsel %vm923, %v1238, 0
      %1245 = vmatprep.subr.bf16.mxu0 0
      %1246 = vmatpush1.bf16.msra.mxu0 0
      %1247 = vmatprep.subr.bf16.mxu0 0
      %1248 = vmatpush1.bf16.msra.mxu0 0
      %1249 = vmatprep.subr.bf16.mxu0 0
      %1250 = vmatpush1.bf16.msra.mxu0 0
      %1251 = vmatprep.subr.bf16.mxu0 0
      %1252 = vmatpush1.bf16.msra.mxu0 0
      %1253 = vmatprep.subr.bf16.mxu0 0
      %1254 = vmatpush1.bf16.msra.mxu0 0
      %1255 = vmatprep.subr.bf16.mxu0 0
      %1256 = vmatpush1.bf16.msra.mxu0 0
      %1257 = vmatprep.subr.bf16.mxu0 0
      %1258 = vmatpush1.bf16.msra.mxu0 0
      %1259 = vmatprep.subr.bf16.mxu0 0
      %1260 = vmatpush1.bf16.msra.mxu0 %v1243
      %1261 = vmatprep.subr.bf16.mxu0 0
      %1262 = vmatpush2.bf16.msra.mxu0 0
      %1263 = vmatprep.subr.bf16.mxu0 0
      %1264 = vmatpush2.bf16.msra.mxu0 0
      %1265 = vmatprep.subr.bf16.mxu0 0
      %1266 = vmatpush2.bf16.msra.mxu0 0
      %1267 = vmatprep.subr.bf16.mxu0 0
      %1268 = vmatpush2.bf16.msra.mxu0 0
      %1269 = vmatprep.subr.bf16.mxu0 0
      %1270 = vmatpush2.bf16.msra.mxu0 0
      %1271 = vmatprep.subr.bf16.mxu0 0
      %1272 = vmatpush2.bf16.msra.mxu0 0
      %1273 = vmatprep.subr.bf16.mxu0 0
      %1274 = vmatpush2.bf16.msra.mxu0 0
      %1275 = vmatprep.subr.bf16.mxu0 0
      %1276 = vmatpush2.bf16.msra.mxu0 0
      %1277 = vmatprep.mubr.bf16.mxu0 0
      %1278 = vmatmul.mubr.bf16.gmra.mxu0 %v1240
      %v1279 = vpop.f32.mrf.mxu0
      %v1280 = vadd.f32 0.0, %v1279
      %v1281 = vpop.f32.mrf.mxu0
      %v1282 = vpop.f32.mrf.mxu0
      %v1283 = vpop.f32.mrf.mxu0
      %1284 = vdwg.mxu0
      %v1285 = vpack.c.bf16 %v1280, %v1280
      %v1287 = vsel %vm851, %v1285, 0
      %v1290 = vsel %vm923, %v845, 0
      %1292 = vmatprep.subr.bf16.mxu0 0
      %1293 = vmatpush1.bf16.msra.mxu0 0
      %1294 = vmatprep.subr.bf16.mxu0 0
      %1295 = vmatpush1.bf16.msra.mxu0 0
      %1296 = vmatprep.subr.bf16.mxu0 0
      %1297 = vmatpush1.bf16.msra.mxu0 0
      %1298 = vmatprep.subr.bf16.mxu0 0
      %1299 = vmatpush1.bf16.msra.mxu0 0
      %1300 = vmatprep.subr.bf16.mxu0 0
      %1301 = vmatpush1.bf16.msra.mxu0 0
      %1302 = vmatprep.subr.bf16.mxu0 0
      %1303 = vmatpush1.bf16.msra.mxu0 0
      %1304 = vmatprep.subr.bf16.mxu0 0
      %1305 = vmatpush1.bf16.msra.mxu0 0
      %1306 = vmatprep.subr.bf16.mxu0 0
      %1307 = vmatpush1.bf16.msra.mxu0 %v1290
      %1308 = vmatprep.subr.bf16.mxu0 0
      %1309 = vmatpush2.bf16.msra.mxu0 0
      %1310 = vmatprep.subr.bf16.mxu0 0
      %1311 = vmatpush2.bf16.msra.mxu0 0
      %1312 = vmatprep.subr.bf16.mxu0 0
      %1313 = vmatpush2.bf16.msra.mxu0 0
      %1314 = vmatprep.subr.bf16.mxu0 0
      %1315 = vmatpush2.bf16.msra.mxu0 0
      %1316 = vmatprep.subr.bf16.mxu0 0
      %1317 = vmatpush2.bf16.msra.mxu0 0
      %1318 = vmatprep.subr.bf16.mxu0 0
      %1319 = vmatpush2.bf16.msra.mxu0 0
      %1320 = vmatprep.subr.bf16.mxu0 0
      %1321 = vmatpush2.bf16.msra.mxu0 0
      %1322 = vmatprep.subr.bf16.mxu0 0
      %1323 = vmatpush2.bf16.msra.mxu0 0
      %1324 = vmatprep.mubr.bf16.mxu0 0
      %1325 = vmatmul.mubr.bf16.gmra.mxu0 %v1287
      %v1326 = vpop.f32.mrf.mxu0
      %v1327 = vadd.f32 0.0, %v1326
      %v1328 = vpop.f32.mrf.mxu0
      %v1329 = vpop.f32.mrf.mxu0
      %v1330 = vpop.f32.mrf.mxu0
      %1331 = vdwg.mxu0
      %v1332 = vadd.f32 %v1168, %v1327
      %1333 = vrot.lane.b32.xlu0 %v847, 104
      %v1334 = vpop.permute.xlu0 %1333
      %1335 = vrot.lane.b32.xlu0 %v847, 72
      %v1336 = vpop.permute.xlu0 %1335
      %v1338 = vsel %vm851, %v1334, 0
      %v1341 = vsel %vm851, %v1336, 0
      %1343 = vmatprep.subr.bf16.mxu0 0
      %1344 = vmatpush1.bf16.xpose.msra.mxu0 0
      %1345 = vmatprep.subr.bf16.mxu0 0
      %1346 = vmatpush1.bf16.xpose.msra.mxu0 0
      %1347 = vmatprep.subr.bf16.mxu0 0
      %1348 = vmatpush1.bf16.xpose.msra.mxu0 0
      %1349 = vmatprep.subr.bf16.mxu0 0
      %1350 = vmatpush1.bf16.xpose.msra.mxu0 0
      %1351 = vmatprep.subr.bf16.mxu0 0
      %1352 = vmatpush1.bf16.xpose.msra.mxu0 0
      %1353 = vmatprep.subr.bf16.mxu0 0
      %1354 = vmatpush1.bf16.xpose.msra.mxu0 0
      %1355 = vmatprep.subr.bf16.mxu0 0
      %1356 = vmatpush1.bf16.xpose.msra.mxu0 0
      %1357 = vmatprep.subr.bf16.mxu0 0
      %1358 = vmatpush1.bf16.xpose.msra.mxu0 %v1341
      %1359 = vmatprep.subr.bf16.mxu0 0
      %1360 = vmatpush2.bf16.xpose.msra.mxu0 0
      %1361 = vmatprep.subr.bf16.mxu0 0
      %1362 = vmatpush2.bf16.xpose.msra.mxu0 0
      %1363 = vmatprep.subr.bf16.mxu0 0
      %1364 = vmatpush2.bf16.xpose.msra.mxu0 0
      %1365 = vmatprep.subr.bf16.mxu0 0
      %1366 = vmatpush2.bf16.xpose.msra.mxu0 0
      %1367 = vmatprep.subr.bf16.mxu0 0
      %1368 = vmatpush2.bf16.xpose.msra.mxu0 0
      %1369 = vmatprep.subr.bf16.mxu0 0
      %1370 = vmatpush2.bf16.xpose.msra.mxu0 0
      %1371 = vmatprep.subr.bf16.mxu0 0
      %1372 = vmatpush2.bf16.xpose.msra.mxu0 0
      %1373 = vmatprep.subr.bf16.mxu0 0
      %1374 = vmatpush2.bf16.xpose.msra.mxu0 0
      %1375 = vmatprep.mubr.bf16.mxu0 0
      %1376 = vmatmul.mubr.bf16.gmra.mxu0 %v1338
      %v1377 = vpop.f32.mrf.mxu0
      %v1378 = vadd.f32 0.0, %v1377
      %v1379 = vpop.f32.mrf.mxu0
      %v1380 = vpop.f32.mrf.mxu0
      %v1381 = vpop.f32.mrf.mxu0
      %1382 = vdwg.mxu0
      %v1383 = vmul.f32 %v1378, 0.35355338
      %v1384 = vadd.f32 %v1383, %v903
      %v1385 = vsel %vm851, %v1384, -inf
      %1386 = vmax.xlane.f32.xlu0 %v1385
      %v1387 = vpop.xlane.xlu0 %1386
      %v1388 = vsub.f32 %v1384, %v1387
      %v1389 = vmul.f32 %v1388, 1.442695
      %v1390 = vpow.pop %v1389
      %v1391 = vsel %vm851, %v1390, 0.0
      %1392 = vadd.xlane.f32.xlu0 %v1391
      %v1393 = vpop.xlane.xlu0 %1392
      %v1394 = vrcp.pop %v1393
      %v1395 = vmul.f32 %v1390, %v1394
      %v1396 = vpack.c.bf16 %v1395, %v1395
      %1397 = vrot.lane.b32.xlu0 %v847, 40
      %v1398 = vpop.permute.xlu0 %1397
      %v1400 = vsel %vm851, %v1396, 0
      %v1403 = vsel %vm923, %v1398, 0
      %1405 = vmatprep.subr.bf16.mxu0 0
      %1406 = vmatpush1.bf16.msra.mxu0 0
      %1407 = vmatprep.subr.bf16.mxu0 0
      %1408 = vmatpush1.bf16.msra.mxu0 0
      %1409 = vmatprep.subr.bf16.mxu0 0
      %1410 = vmatpush1.bf16.msra.mxu0 0
      %1411 = vmatprep.subr.bf16.mxu0 0
      %1412 = vmatpush1.bf16.msra.mxu0 0
      %1413 = vmatprep.subr.bf16.mxu0 0
      %1414 = vmatpush1.bf16.msra.mxu0 0
      %1415 = vmatprep.subr.bf16.mxu0 0
      %1416 = vmatpush1.bf16.msra.mxu0 0
      %1417 = vmatprep.subr.bf16.mxu0 0
      %1418 = vmatpush1.bf16.msra.mxu0 0
      %1419 = vmatprep.subr.bf16.mxu0 0
      %1420 = vmatpush1.bf16.msra.mxu0 %v1403
      %1421 = vmatprep.subr.bf16.mxu0 0
      %1422 = vmatpush2.bf16.msra.mxu0 0
      %1423 = vmatprep.subr.bf16.mxu0 0
      %1424 = vmatpush2.bf16.msra.mxu0 0
      %1425 = vmatprep.subr.bf16.mxu0 0
      %1426 = vmatpush2.bf16.msra.mxu0 0
      %1427 = vmatprep.subr.bf16.mxu0 0
      %1428 = vmatpush2.bf16.msra.mxu0 0
      %1429 = vmatprep.subr.bf16.mxu0 0
      %1430 = vmatpush2.bf16.msra.mxu0 0
      %1431 = vmatprep.subr.bf16.mxu0 0
      %1432 = vmatpush2.bf16.msra.mxu0 0
      %1433 = vmatprep.subr.bf16.mxu0 0
      %1434 = vmatpush2.bf16.msra.mxu0 0
      %1435 = vmatprep.subr.bf16.mxu0 0
      %1436 = vmatpush2.bf16.msra.mxu0 0
      %1437 = vmatprep.mubr.bf16.mxu0 0
      %1438 = vmatmul.mubr.bf16.gmra.mxu0 %v1400
      %v1439 = vpop.f32.mrf.mxu0
      %v1440 = vadd.f32 0.0, %v1439
      %v1441 = vpop.f32.mrf.mxu0
      %v1442 = vpop.f32.mrf.mxu0
      %v1443 = vpop.f32.mrf.mxu0
      %1444 = vdwg.mxu0
      %v1445 = vpack.c.bf16 %v1440, %v1440
      %v1447 = vsel %vm851, %v1445, 0
      %v1450 = vsel %vm923, %v846, 0
      %1452 = vmatprep.subr.bf16.mxu0 0
      %1453 = vmatpush1.bf16.msra.mxu0 0
      %1454 = vmatprep.subr.bf16.mxu0 0
      %1455 = vmatpush1.bf16.msra.mxu0 0
      %1456 = vmatprep.subr.bf16.mxu0 0
      %1457 = vmatpush1.bf16.msra.mxu0 0
      %1458 = vmatprep.subr.bf16.mxu0 0
      %1459 = vmatpush1.bf16.msra.mxu0 0
      %1460 = vmatprep.subr.bf16.mxu0 0
      %1461 = vmatpush1.bf16.msra.mxu0 0
      %1462 = vmatprep.subr.bf16.mxu0 0
      %1463 = vmatpush1.bf16.msra.mxu0 0
      %1464 = vmatprep.subr.bf16.mxu0 0
      %1465 = vmatpush1.bf16.msra.mxu0 0
      %1466 = vmatprep.subr.bf16.mxu0 0
      %1467 = vmatpush1.bf16.msra.mxu0 %v1450
      %1468 = vmatprep.subr.bf16.mxu0 0
      %1469 = vmatpush2.bf16.msra.mxu0 0
      %1470 = vmatprep.subr.bf16.mxu0 0
      %1471 = vmatpush2.bf16.msra.mxu0 0
      %1472 = vmatprep.subr.bf16.mxu0 0
      %1473 = vmatpush2.bf16.msra.mxu0 0
      %1474 = vmatprep.subr.bf16.mxu0 0
      %1475 = vmatpush2.bf16.msra.mxu0 0
      %1476 = vmatprep.subr.bf16.mxu0 0
      %1477 = vmatpush2.bf16.msra.mxu0 0
      %1478 = vmatprep.subr.bf16.mxu0 0
      %1479 = vmatpush2.bf16.msra.mxu0 0
      %1480 = vmatprep.subr.bf16.mxu0 0
      %1481 = vmatpush2.bf16.msra.mxu0 0
      %1482 = vmatprep.subr.bf16.mxu0 0
      %1483 = vmatpush2.bf16.msra.mxu0 0
      %1484 = vmatprep.mubr.bf16.mxu0 0
      %1485 = vmatmul.mubr.bf16.gmra.mxu0 %v1447
      %v1486 = vpop.f32.mrf.mxu0
      %v1487 = vadd.f32 0.0, %v1486
      %v1488 = vpop.f32.mrf.mxu0
      %v1489 = vpop.f32.mrf.mxu0
      %v1490 = vpop.f32.mrf.mxu0
      %1491 = vdwg.mxu0
      %v1492 = vadd.f32 %v1332, %v1487
      %v1493 = vld [vmem:[%s702] sm:$0x1]
      %v1495 = vlaneseq
      %v1496 = vshrl.u32 %v1495, 7
      %v1497 = vsub.s32 0, %v1496
      %v1498 = vrot.slane %v1493, %v1497
      %v1500 = vadd.f32 %v1492, %v1498
      %v1501 = vadd.f32 %v1500, %v773
      %v1502 = vld [vmem:[%s705] sm:$0x1]
      %v1503 = vld [vmem:[%s708] sm:$0x1]
      %v1504 = vsel %vm799, %v1501, 0.0
      %1505 = vadd.xlane.f32.xlu0 %v1504
      %v1506 = vpop.xlane.xlu0 %1505
      %v1507 = vrcp.pop 32.0
      %v1508 = vmul.f32 %v1506, %v1507
      %v1509 = vsub.f32 %v1501, %v1508
      %v1510 = vmul.f32 %v1509, %v1509
      %v1511 = vsel %vm799, %v1510, 0.0
      %1512 = vadd.xlane.f32.xlu0 %v1511
      %v1513 = vpop.xlane.xlu0 %1512
      %v1514 = vmul.f32 %v1513, %v1507
      %v1515 = vadd.f32 %v1514, 1e-12
      %v1516 = vrsqrt.pop %v1515
      %v1517 = vmul.f32 %v1509, %v1516
      %v1519 = vlaneseq
      %v1520 = vshrl.u32 %v1519, 7
      %v1521 = vsub.s32 0, %v1520
      %v1522 = vrot.slane %v1502, %v1521
      %v1524 = vmul.f32 %v1517, %v1522
      %v1526 = vlaneseq
      %v1527 = vshrl.u32 %v1526, 7
      %v1528 = vsub.s32 0, %v1527
      %v1529 = vrot.slane %v1503, %v1528
      %v1531 = vadd.f32 %v1524, %v1529
      %v1532 = vpack.c.bf16 %v1531, %v1531
      %v1533 = vld [vmem:[%s713] sm:$0xf]
      %v1534 = vld [vmem:[%s713 + $0x4] sm:$0xf]
      %v1535 = vld [vmem:[%s713 + $0x8] sm:$0xf]
      %v1536 = vld [vmem:[%s713 + $0xc] sm:$0xf]
      %v1537 = vld [vmem:[%s716] sm:$0x1]
      %v1539 = vlaneseq
      %v1540 = vshrl.u32 %v1539, 7
      %v1541 = vsub.s32 0, %v1540
      %v1542 = vrot.slane %v1537, %v1541
      %v1548 = vunpack.c.l.b16 %v1533
      %v1549 = vunpack.c.l.b16 %v1534
      %v1550 = vunpack.c.l.b16 %v1535
      %v1551 = vunpack.c.l.b16 %v1536
      %v1552 = vpack.c.b16 %v1549, %v1548
      %v1553 = vpack.c.b16 %v1551, %v1550
      %v1557 = vsel %vm799, %v1532, 0
      %1559 = vmatprep.subr.bf16.mxu0 0
      %1560 = vmatpush1.bf16.msra.mxu0 0
      %1561 = vmatprep.subr.bf16.mxu0 0
      %1562 = vmatpush1.bf16.msra.mxu0 0
      %1563 = vmatprep.subr.bf16.mxu0 0
      %1564 = vmatpush1.bf16.msra.mxu0 0
      %1565 = vmatprep.subr.bf16.mxu0 0
      %1566 = vmatpush1.bf16.msra.mxu0 0
      %1567 = vmatprep.subr.bf16.mxu0 0
      %1568 = vmatpush1.bf16.msra.mxu0 0
      %1569 = vmatprep.subr.bf16.mxu0 0
      %1570 = vmatpush1.bf16.msra.mxu0 0
      %1571 = vmatprep.subr.bf16.mxu0 0
      %1572 = vmatpush1.bf16.msra.mxu0 %v1553
      %1573 = vmatprep.subr.bf16.mxu0 0
      %1574 = vmatpush1.bf16.msra.mxu0 %v1552
      %1575 = vmatprep.subr.bf16.mxu0 0
      %1576 = vmatpush2.bf16.msra.mxu0 0
      %1577 = vmatprep.subr.bf16.mxu0 0
      %1578 = vmatpush2.bf16.msra.mxu0 0
      %1579 = vmatprep.subr.bf16.mxu0 0
      %1580 = vmatpush2.bf16.msra.mxu0 0
      %1581 = vmatprep.subr.bf16.mxu0 0
      %1582 = vmatpush2.bf16.msra.mxu0 0
      %1583 = vmatprep.subr.bf16.mxu0 0
      %1584 = vmatpush2.bf16.msra.mxu0 0
      %1585 = vmatprep.subr.bf16.mxu0 0
      %1586 = vmatpush2.bf16.msra.mxu0 0
      %1587 = vmatprep.subr.bf16.mxu0 0
      %1588 = vmatpush2.bf16.msra.mxu0 0
      %1589 = vmatprep.subr.bf16.mxu0 0
      %1590 = vmatpush2.bf16.msra.mxu0 0
      %1591 = vmatprep.mubr.bf16.mxu0 0
      %1592 = vmatmul.mubr.bf16.gmra.mxu0 %v1557
      %v1593 = vpop.f32.mrf.mxu0
      %v1594 = vadd.f32 %v1542, %v1593
      %v1595 = vpop.f32.mrf.mxu0
      %v1596 = vpop.f32.mrf.mxu0
      %v1597 = vpop.f32.mrf.mxu0
      %1598 = vdwg.mxu0
      %v1599 = vmul.f32 %v1594, %v1594
      %v1600 = vmul.f32 %v1594, %v1599
      %v1601 = vmul.f32 %v1600, 0.044715
      %v1602 = vadd.f32 %v1594, %v1601
      %v1603 = vmul.f32 %v1602, 0.7978846
      %v1604 = vtanh.pop %v1603
      %v1605 = vadd.f32 %v1604, 1.0
      %v1606 = vmul.f32 %v1605, 0.5
      %v1607 = vmul.f32 %v1594, %v1606
      %v1608 = vpack.c.bf16 %v1607, %v1607
      %v1609 = vld [vmem:[%s721] sm:$0xf]
      %v1610 = vld [vmem:[%s721 + $0x4] sm:$0xf]
      %v1611 = vld [vmem:[%s721 + $0x8] sm:$0xf]
      %v1612 = vld [vmem:[%s721 + $0xc] sm:$0xf]
      %v1613 = vld [vmem:[%s721 + $0x10] sm:$0xf]
      %v1614 = vld [vmem:[%s721 + $0x14] sm:$0xf]
      %v1615 = vld [vmem:[%s721 + $0x18] sm:$0xf]
      %v1616 = vld [vmem:[%s721 + $0x1c] sm:$0xf]
      %v1617 = vld [vmem:[%s724] sm:$0x1]
      %v1619 = vlaneseq
      %v1620 = vshrl.u32 %v1619, 7
      %v1621 = vsub.s32 0, %v1620
      %v1622 = vrot.slane %v1617, %v1621
      %v1632 = vunpack.c.l.b16 %v1609
      %v1633 = vunpack.c.l.b16 %v1610
      %v1634 = vunpack.c.l.b16 %v1611
      %v1635 = vunpack.c.l.b16 %v1612
      %v1636 = vunpack.c.l.b16 %v1613
      %v1637 = vunpack.c.l.b16 %v1614
      %v1638 = vunpack.c.l.b16 %v1615
      %v1639 = vunpack.c.l.b16 %v1616
      %v1640 = vpack.c.b16 %v1633, %v1632
      %v1641 = vpack.c.b16 %v1635, %v1634
      %v1642 = vpack.c.b16 %v1637, %v1636
      %v1643 = vpack.c.b16 %v1639, %v1638
      %vm1648 = vcmask 523264
      %v1650 = vsel %vm1648, %v1608, 0
      %1652 = vmatprep.subr.bf16.mxu0 0
      %1653 = vmatpush1.bf16.msra.mxu0 0
      %1654 = vmatprep.subr.bf16.mxu0 0
      %1655 = vmatpush1.bf16.msra.mxu0 0
      %1656 = vmatprep.subr.bf16.mxu0 0
      %1657 = vmatpush1.bf16.msra.mxu0 0
      %1658 = vmatprep.subr.bf16.mxu0 0
      %1659 = vmatpush1.bf16.msra.mxu0 0
      %1660 = vmatprep.subr.bf16.mxu0 0
      %1661 = vmatpush1.bf16.msra.mxu0 %v1643
      %1662 = vmatprep.subr.bf16.mxu0 0
      %1663 = vmatpush1.bf16.msra.mxu0 %v1642
      %1664 = vmatprep.subr.bf16.mxu0 0
      %1665 = vmatpush1.bf16.msra.mxu0 %v1641
      %1666 = vmatprep.subr.bf16.mxu0 0
      %1667 = vmatpush1.bf16.msra.mxu0 %v1640
      %1668 = vmatprep.subr.bf16.mxu0 0
      %1669 = vmatpush2.bf16.msra.mxu0 0
      %1670 = vmatprep.subr.bf16.mxu0 0
      %1671 = vmatpush2.bf16.msra.mxu0 0
      %1672 = vmatprep.subr.bf16.mxu0 0
      %1673 = vmatpush2.bf16.msra.mxu0 0
      %1674 = vmatprep.subr.bf16.mxu0 0
      %1675 = vmatpush2.bf16.msra.mxu0 0
      %1676 = vmatprep.subr.bf16.mxu0 0
      %1677 = vmatpush2.bf16.msra.mxu0 0
      %1678 = vmatprep.subr.bf16.mxu0 0
      %1679 = vmatpush2.bf16.msra.mxu0 0
      %1680 = vmatprep.subr.bf16.mxu0 0
      %1681 = vmatpush2.bf16.msra.mxu0 0
      %1682 = vmatprep.subr.bf16.mxu0 0
      %1683 = vmatpush2.bf16.msra.mxu0 0
      %1684 = vmatprep.mubr.bf16.mxu0 0
      %1685 = vmatmul.mubr.bf16.gmra.mxu0 %v1650
      %v1686 = vpop.f32.mrf.mxu0
      %v1687 = vadd.f32 %v1622, %v1686
      %v1688 = vpop.f32.mrf.mxu0
      %v1689 = vpop.f32.mrf.mxu0
      %v1690 = vpop.f32.mrf.mxu0
      %1691 = vdwg.mxu0
      %v1692 = vadd.f32 %v1687, %v1531
      %v1693 = vld [vmem:[%s727] sm:$0x1]
      %v1694 = vld [vmem:[%s730] sm:$0x1]
      %v1695 = vsel %vm799, %v1692, 0.0
      %1696 = vadd.xlane.f32.xlu0 %v1695
      %v1697 = vpop.xlane.xlu0 %1696
      %v1698 = vmul.f32 %v1697, %v1507
      %v1699 = vsub.f32 %v1692, %v1698
      %v1700 = vmul.f32 %v1699, %v1699
      %v1701 = vsel %vm799, %v1700, 0.0
      %1702 = vadd.xlane.f32.xlu0 %v1701
      %v1703 = vpop.xlane.xlu0 %1702
      %v1704 = vmul.f32 %v1703, %v1507
      %v1705 = vadd.f32 %v1704, 1e-12
      %v1706 = vrsqrt.pop %v1705
      %v1707 = vmul.f32 %v1699, %v1706
      %v1709 = vlaneseq
      %v1710 = vshrl.u32 %v1709, 7
      %v1711 = vsub.s32 0, %v1710
      %v1712 = vrot.slane %v1693, %v1711
      %v1714 = vmul.f32 %v1707, %v1712
      %v1716 = vlaneseq
      %v1717 = vshrl.u32 %v1716, 7
      %v1718 = vsub.s32 0, %v1717
      %v1719 = vrot.slane %v1694, %v1718
      %v1721 = vadd.f32 %v1714, %v1719
      %1722 = vst.msk [vmem:[%s734] sm:$0xff] %vm799, %v1721
      %p1723 = scmp.lt.s32.totalorder %s31, 1
      %s1724 = scalar_select %p1723, %s31, 1
      %s1725 = smul.addr %s1724, 8
      %s1726 = scalar_lea.vmem %s16, %s1725
      // Predicated region
      $region89: #{simcse_forward.2} parent=83 // pred_check
        %p1727 = pneg %p463
      $region90: #{simcse_forward.2} parent=83 // pred_check_branch
        %1729 = sbr.rel (%p1727) target = $region92
      $region91: #{simcse_forward.2} parent=83 // pred_region
        _
      $region92: #{simcse_forward.2} parent=83 // pred_fallthru
        _
    $region84: #{simcse_forward.2} parent=5 // pred_fallthru
      _
    %p1730 = scmp.le.s32.totalorder 2, %s22
    // Predicated region
    $region93: #{simcse_forward.2} parent=5 // pred_check
      %p1731 = pneg %p1730
    $region94: #{simcse_forward.2} parent=5 // pred_check_branch
      %1733 = sbr.rel (%p1731) target = $region96
    $region95: #{simcse_forward.2} parent=5 // pred_region
      %s1734 = ssub.s32 %s22, 2
      // Predicated region
      $region97: #{simcse_forward.2} parent=95 // pred_check
        %p1735 = pneg %p469
      $region98: #{simcse_forward.2} parent=95 // pred_check_branch
        %1737 = sbr.rel (%p1735) target = $region100
      $region99: #{simcse_forward.2} parent=95 // pred_region
        %p1738 = scmp.lt.s32.totalorder %s33, 1
        %s1739 = scalar_select %p1738, %s33, 1
        %s1740 = smul.addr %s1739, 8
        %s1741 = scalar_lea.vmem %s16, %s1740
      $region100: #{simcse_forward.2} parent=95 // pred_fallthru
        _
    $region96: #{simcse_forward.2} parent=5 // pred_fallthru
      _
  $region6: #{simcse_forward.2} parent=0 // loop_footer
    %s26 = sadd.s32 1, %s22
  $region7: #{simcse_forward.2} parent=0 // loop_footer_branch
    %21 = sbr.rel target = $region3
  $region8: #{simcse_forward.2} parent=0 // loop_exit
    _

</llo_original>
